<compile_context>
chip_gen: v5e
topology: v5e:2x2
jax: 0.10.0
libtpu: 0.0.40
codegen_flags: <defaults>
</compile_context>

<pallas_src>
import functools

import jax
import jax.numpy as jnp
from jax.experimental import pallas as pl
from jax.experimental.pallas import tpu as pltpu


def _ft_kernel(x_ref, ln_g_ref, ln_b_ref, wqkv_ref, wo_ref, wff_ref, bff_ref,
               o_ref, qkv_scr, ao_scr, *, bt, n, heads, dim_head, tau):
    """One depth step of TransformerFT for a tile of `bt` batch elements."""
    d = pl.program_id(1)
    inner = heads * dim_head

    # First layer of this batch tile: bring x into the resident output block.
    @pl.when(d == 0)
    def _():
        o_ref[...] = x_ref[...]

    x = o_ref[...]                                       # (bt*n, D) float32

    # ---- Attention.norm: LayerNorm over the feature axis (torch eps = 1e-5)
    mu = jnp.mean(x, axis=-1, keepdims=True)
    var = jnp.mean((x - mu) ** 2, axis=-1, keepdims=True)
    xn = (x - mu) * jax.lax.rsqrt(var + 1e-5)
    xn = xn * ln_g_ref[0] + ln_b_ref[0]
    xn16 = xn.astype(jnp.bfloat16)                       # MXU operands in bf16

    # ---- fused q/k/v projection: ONE (rows, D) @ (D, 3*inner) matmul.
    #      The attention scale is already folded into the q columns at init.
    #      Result is staged in VMEM scratch (bounded live ranges).
    qkv = jnp.dot(xn16, wqkv_ref[0], preferred_element_type=jnp.float32)
    qkv_scr[...] = qkv.astype(jnp.bfloat16)              # (rows, 3*inner)

    # ---- per-batch softmax attention; per-head outputs are lane-concatenated
    #      into the (rows, inner) attention-output scratch.
    for b in range(bt):
        r0 = b * n                                       # sublane-aligned rows
        qkv_b = qkv_scr[r0:r0 + n, :]                    # (n, 3*inner) bf16
        head_outs = []
        for h in range(heads):
            c = h * dim_head
            q_bh = qkv_b[:, c:c + dim_head]
            k_bh = qkv_b[:, inner + c:inner + c + dim_head]
            v_bh = qkv_b[:, 2 * inner + c:2 * inner + c + dim_head]
            dots = jax.lax.dot_general(                  # q @ k^T, f32 accumulate
                q_bh, k_bh, (((1,), (1,)), ((), ())),
                preferred_element_type=jnp.float32)      # scale folded into Wq
            m = jnp.max(dots, axis=-1, keepdims=True)
            e = jnp.exp(dots - m)
            inv = pl.reciprocal(jnp.sum(e, axis=-1, keepdims=True), approx=False)
            attn = e * inv     # dropout(p=0) and the `d=1` factor are identities
            oh = jnp.dot(attn.astype(jnp.bfloat16), v_bh,
                         preferred_element_type=jnp.float32)
            head_outs.append(oh.astype(jnp.bfloat16))
        ao_b = head_outs[0] if heads == 1 else jnp.concatenate(head_outs, axis=-1)
        ao_scr[r0:r0 + n, :] = ao_b                      # (n, inner) bf16

    # ---- single Wo matmul over ALL rows and heads: (rows, inner) @ (inner, D)
    attn_out = jnp.dot(ao_scr[...], wo_ref[0], preferred_element_type=jnp.float32)
    # x = tau * attn(x) + (1 - tau) * x
    x = tau * attn_out + (1.0 - tau) * x

    # ---- weight-normed FF Linear(dim, dim) with bias (effective W at init = v)
    ff = jnp.dot(x.astype(jnp.bfloat16), wff_ref[0],
                 preferred_element_type=jnp.float32) + bff_ref[0]
    # x = tau * ff(x) + (1 - tau) * x
    x = tau * ff + (1.0 - tau) * x

    o_ref[...] = x.astype(o_ref.dtype)


def transformer_ft(x, params, *, heads, dim_head, tau, batch_tile=None):
    """Full TransformerFT forward (all depth layers) in a single pallas_call."""
    B, N, D = x.shape
    depth = params["ln_g"].shape[0]
    inner = heads * dim_head
    # Default: one batch tile so stacked per-layer weights stream from HBM
    # exactly once per forward (best on single-TC v5e/v6e).
    # On v7x pass batch_tile=B//2 so the "parallel" axis occupies both cores.
    bt = B if batch_tile is None else batch_tile
    assert B % bt == 0 and (bt * N) % 8 == 0
    rows = bt * N

    kernel = functools.partial(_ft_kernel, bt=bt, n=N, heads=heads,
                               dim_head=dim_head, tau=tau)

    out = pl.pallas_call(
        kernel,
        out_shape=jax.ShapeDtypeStruct((B * N, D), x.dtype),
        grid=(B // bt, depth),        # depth trailing -> x stays VMEM-resident
        in_specs=[
            pl.BlockSpec((rows, D), lambda i, d: (i, 0)),              # x
            pl.BlockSpec((1, 1, D), lambda i, d: (d, 0, 0)),           # ln gamma
            pl.BlockSpec((1, 1, D), lambda i, d: (d, 0, 0)),           # ln beta
            pl.BlockSpec((1, D, 3 * inner), lambda i, d: (d, 0, 0)),   # Wqkv
            pl.BlockSpec((1, inner, D), lambda i, d: (d, 0, 0)),       # Wo
            pl.BlockSpec((1, D, D), lambda i, d: (d, 0, 0)),           # Wff
            pl.BlockSpec((1, 1, D), lambda i, d: (d, 0, 0)),           # bff
        ],
        out_specs=pl.BlockSpec((rows, D), lambda i, d: (i, 0)),
        scratch_shapes=[
            pltpu.VMEM((rows, 3 * inner), jnp.bfloat16),   # fused qkv staging
            pltpu.VMEM((rows, inner), jnp.bfloat16),       # attention outputs
        ],
        compiler_params=pltpu.CompilerParams(
            dimension_semantics=("parallel", "arbitrary"),
            vmem_limit_bytes=64 * 1024 * 1024),
    )(x.reshape(B * N, D), params["ln_g"], params["ln_b"], params["wqkv"],
      params["wo"], params["wff"], params["bff"])
    return out.reshape(B, N, D)


# ----------------------- deterministic parameter init -----------------------

def init_params(key, depth, dim, heads, dim_head):
    inner = heads * dim_head
    scale = dim_head ** (-0.5)

    def linear_w(k, out_d, in_d):
        bound = 1.0 / (in_d ** 0.5)                       # torch nn.Linear init
        return jax.random.uniform(k, (out_d, in_d), jnp.float32, -bound, bound)

    wqkv_l, wo_l, wff_l, bff_l = [], [], [], []
    for _ in range(depth):
        keys = jax.random.split(key, 7)
        key = keys[0]
        wq = linear_w(keys[1], inner, dim)                # torch (out, in) layout
        wk = linear_w(keys[2], inner, dim)
        # nn.utils.weight_norm: effective weight at init equals v (g = ||v||).
        wv = linear_w(keys[3], inner, dim)
        wo = linear_w(keys[4], dim, inner)
        wff = linear_w(keys[5], dim, dim)
        bound = 1.0 / (dim ** 0.5)
        bff = jax.random.uniform(keys[6], (dim,), jnp.float32, -bound, bound)

        # Kernel layouts (x @ W).  Column order of Wqkv = [q | k | v], each
        # block head-major, matching rearrange('b n (h d) -> b h n d').
        # The attention scale is folded into the q block (f32, then cast once).
        wqkv_l.append(jnp.concatenate([wq.T * scale, wk.T, wv.T], axis=1))  # (D, 3*inner)
        wo_l.append(wo.T)                                                   # (inner, D)
        wff_l.append(wff.T)                                                 # (D, D)
        bff_l.append(bff.reshape(1, dim))                                   # (1, D)

    stack = lambda xs, dt: jnp.stack(xs).astype(dt)
    return dict(
        ln_g=jnp.ones((depth, 1, dim), jnp.float32),      # torch LayerNorm init
        ln_b=jnp.zeros((depth, 1, dim), jnp.float32),
        wqkv=stack(wqkv_l, jnp.bfloat16),                 # bf16 weights for MXU
        wo=stack(wo_l, jnp.bfloat16),
        wff=stack(wff_l, jnp.bfloat16),
        bff=stack(bff_l, jnp.float32),
    )


# ----------------------------- pure-JAX reference ---------------------------

def _reference(x, params, *, heads, dim_head, tau):
    depth = params["ln_g"].shape[0]
    B, N, D = x.shape
    inner = heads * dim_head
    f32 = lambda a: a.astype(jnp.float32)
    for l in range(depth):
        g, b = f32(params["ln_g"][l, 0]), f32(params["ln_b"][l, 0])
        wqkv, wo = f32(params["wqkv"][l]), f32(params["wo"][l])
        wff, bff = f32(params["wff"][l]), f32(params["bff"][l, 0])

        mu = jnp.mean(x, axis=-1, keepdims=True)
        var = jnp.mean((x - mu) ** 2, axis=-1, keepdims=True)
        xn = (x - mu) / jnp.sqrt(var + 1e-5) * g + b
        qkv = jnp.einsum("bnd,de->bne", xn, wqkv)
        q, k, v = jnp.split(qkv, 3, axis=-1)
        to_heads = lambda t: t.reshape(B, N, heads, dim_head).transpose(0, 2, 1, 3)
        q, k, v = to_heads(q), to_heads(k), to_heads(v)
        dots = jnp.einsum("bhne,bhme->bhnm", q, k)        # scale folded into Wqkv
        attn = jax.nn.softmax(dots, axis=-1)
        out = jnp.einsum("bhnm,bhme->bhne", attn, v)
        out = out.transpose(0, 2, 1, 3).reshape(B, N, inner)
        attn_out = jnp.einsum("bne,ed->bnd", out, wo)
        x = tau * attn_out + (1.0 - tau) * x
        ff = jnp.einsum("bnd,de->bne", x, wff) + bff
        x = tau * ff + (1.0 - tau) * x
    return x


if __name__ == "__main__":
    # dim_head=64 (module default); D = heads*dim_head = 128 keeps every
    # output / weight block lane-dense (multiple of 128).
    B, N, D = 2, 8, 128
    heads, dim_head, depth, tau = 2, 64, 2, 0.5

    key = jax.random.PRNGKey(0)
    kx, kp = jax.random.split(key)
    x = jax.random.normal(kx, (B, N, D), jnp.float32)
    params = init_params(kp, depth, D, heads, dim_head)

    y = transformer_ft(x, params, heads=heads, dim_head=dim_head, tau=tau)
    jax.block_until_ready(y)

    y_ref = _reference(x, params, heads=heads, dim_head=dim_head, tau=tau)
    assert y.shape == (B, N, D)
    assert jnp.allclose(y, y_ref, atol=2e-2, rtol=2e-2), "mismatch vs reference"

    print("KERNEL_OK")
</pallas_src>

<mosaic_0001>
module attributes {stable_mosaic.version = 11 : i64} {
  func.func @_ft_kernel(%arg0: i32, %arg1: i32, %arg2: memref<16x128xf32, #tpu.memory_space<vmem>>, %arg3: memref<1x1x128xf32, #tpu.memory_space<vmem>>, %arg4: memref<1x1x128xf32, #tpu.memory_space<vmem>>, %arg5: memref<1x128x384xbf16, #tpu.memory_space<vmem>>, %arg6: memref<1x128x128xbf16, #tpu.memory_space<vmem>>, %arg7: memref<1x128x128xbf16, #tpu.memory_space<vmem>>, %arg8: memref<1x1x128xf32, #tpu.memory_space<vmem>>, %arg9: memref<16x128xf32, #tpu.memory_space<vmem>>, %arg10: memref<16x384xbf16, #tpu.memory_space<vmem>>, %arg11: memref<16x128xbf16, #tpu.memory_space<vmem>>) attributes {dimension_semantics = [#tpu.dimension_semantics<parallel>, #tpu.dimension_semantics<arbitrary>], iteration_bounds = array<i64: 1, 2>, scalar_prefetch = 0 : i64, scratch_operands = 2 : i64, tpu.core_type = #tpu.core_type<tc>, window_params = [{transform_indices = @transform_0, window_bounds = array<i64: 16, 128>}, {transform_indices = @transform_1, window_bounds = array<i64: 1, 1, 128>}, {transform_indices = @transform_2, window_bounds = array<i64: 1, 1, 128>}, {transform_indices = @transform_3, window_bounds = array<i64: 1, 128, 384>}, {transform_indices = @transform_4, window_bounds = array<i64: 1, 128, 128>}, {transform_indices = @transform_5, window_bounds = array<i64: 1, 128, 128>}, {transform_indices = @transform_6, window_bounds = array<i64: 1, 1, 128>}, {transform_indices = @transform_7, window_bounds = array<i64: 16, 128>}]} {
    %c0_i32 = arith.constant 0 : i32
    %0 = arith.cmpi eq, %arg1, %c0_i32 : i32
    %1 = arith.extui %0 : i1 to i32
    %c0_i32_0 = arith.constant 0 : i32
    %2 = arith.cmpi ne, %1, %c0_i32_0 : i32
    scf.if %2 {
      %c0_60 = arith.constant 0 : index
      %c0_61 = arith.constant 0 : index
      %133 = vector.load %arg2[%c0_60, %c0_61] : memref<16x128xf32, #tpu.memory_space<vmem>>, vector<16x128xf32>
      %c0_62 = arith.constant 0 : index
      %c0_63 = arith.constant 0 : index
      %134 = vector.load %arg9[%c0_62, %c0_63] : memref<16x128xf32, #tpu.memory_space<vmem>>, vector<16x128xf32>
      tpu.vector_store %arg9[%c0_62, %c0_63], %133 {strides = array<i32>} : memref<16x128xf32, #tpu.memory_space<vmem>>, vector<16x128xf32>,
    } else {
    }
    %c0 = arith.constant 0 : index
    %c0_1 = arith.constant 0 : index
    %3 = vector.load %arg9[%c0, %c0_1] : memref<16x128xf32, #tpu.memory_space<vmem>>, vector<16x128xf32>
    %cst = arith.constant dense<0.000000e+00> : vector<16xf32>
    %4 = vector.multi_reduction <add>, %3, %cst [1] : vector<16x128xf32> to vector<16xf32>
    %5 = vector.shape_cast %4 : vector<16xf32> to vector<16x1xf32>
    %cst_2 = arith.constant 1.280000e+02 : f32
    %6 = vector.broadcast %cst_2 : f32 to vector<16x1xf32>
    %7 = arith.divf %5, %6 : vector<16x1xf32>
    %8 = vector.broadcast %7 : vector<16x1xf32> to vector<16x128xf32>
    %9 = arith.subf %3, %8 : vector<16x128xf32>
    %10 = arith.mulf %9, %9 : vector<16x128xf32>
    %cst_3 = arith.constant dense<0.000000e+00> : vector<16xf32>
    %11 = vector.multi_reduction <add>, %10, %cst_3 [1] : vector<16x128xf32> to vector<16xf32>
    %12 = vector.shape_cast %11 : vector<16xf32> to vector<16x1xf32>
    %cst_4 = arith.constant 1.280000e+02 : f32
    %13 = vector.broadcast %cst_4 : f32 to vector<16x1xf32>
    %14 = arith.divf %12, %13 : vector<16x1xf32>
    %15 = vector.broadcast %7 : vector<16x1xf32> to vector<16x128xf32>
    %16 = arith.subf %3, %15 : vector<16x128xf32>
    %cst_5 = arith.constant 9.99999974E-6 : f32
    %17 = vector.broadcast %cst_5 : f32 to vector<16x1xf32>
    %18 = arith.addf %14, %17 : vector<16x1xf32>
    %19 = math.rsqrt %18 : vector<16x1xf32>
    %20 = vector.broadcast %19 : vector<16x1xf32> to vector<16x128xf32>
    %21 = arith.mulf %16, %20 : vector<16x128xf32>
    %c0_6 = arith.constant 0 : index
    %c0_7 = arith.constant 0 : index
    %c0_8 = arith.constant 0 : index
    %22 = vector.load %arg3[%c0_6, %c0_7, %c0_8] : memref<1x1x128xf32, #tpu.memory_space<vmem>>, vector<1x1x128xf32>
    %23 = vector.shape_cast %22 : vector<1x1x128xf32> to vector<1x128xf32>
    %24 = vector.broadcast %23 : vector<1x128xf32> to vector<16x128xf32>
    %25 = arith.mulf %21, %24 : vector<16x128xf32>
    %c0_9 = arith.constant 0 : index
    %c0_10 = arith.constant 0 : index
    %c0_11 = arith.constant 0 : index
    %26 = vector.load %arg4[%c0_9, %c0_10, %c0_11] : memref<1x1x128xf32, #tpu.memory_space<vmem>>, vector<1x1x128xf32>
    %27 = vector.shape_cast %26 : vector<1x1x128xf32> to vector<1x128xf32>
    %28 = vector.broadcast %27 : vector<1x128xf32> to vector<16x128xf32>
    %29 = arith.addf %25, %28 : vector<16x128xf32>
    %30 = arith.truncf %29 : vector<16x128xf32> to vector<16x128xbf16>
    %c0_12 = arith.constant 0 : index
    %c0_13 = arith.constant 0 : index
    %c0_14 = arith.constant 0 : index
    %31 = vector.load %arg5[%c0_12, %c0_13, %c0_14] : memref<1x128x384xbf16, #tpu.memory_space<vmem>>, vector<1x128x384xbf16>
    %32 = vector.shape_cast %31 : vector<1x128x384xbf16> to vector<128x384xbf16>
    %cst_15 = arith.constant dense<0.000000e+00> : vector<16x384xf32>
    %33 = tpu.matmul %30, %32, %cst_15 {dimension_numbers = #tpu.dot_dimension_numbers<[1], [0], [0], [1], [0, 0, 1, 1], [], []>} : vector<16x128xbf16>, vector<128x384xbf16>, vector<16x384xf32> -> vector<16x384xf32>
    %34 = arith.truncf %33 : vector<16x384xf32> to vector<16x384xbf16>
    %c0_16 = arith.constant 0 : index
    %c0_17 = arith.constant 0 : index
    %35 = vector.load %arg10[%c0_16, %c0_17] : memref<16x384xbf16, #tpu.memory_space<vmem>>, vector<16x384xbf16>
    tpu.vector_store %arg10[%c0_16, %c0_17], %34 {strides = array<i32>} : memref<16x384xbf16, #tpu.memory_space<vmem>>, vector<16x384xbf16>,
    %c0_18 = arith.constant 0 : index
    %c0_19 = arith.constant 0 : index
    %36 = vector.load %arg10[%c0_18, %c0_19] : memref<16x384xbf16, #tpu.memory_space<vmem>>, vector<8x384xbf16>
    %37 = vector.extract_strided_slice %36 {offsets = [0, 0], sizes = [8, 64], strides = [1, 1]} : vector<8x384xbf16> to vector<8x64xbf16>
    %38 = vector.extract_strided_slice %36 {offsets = [0, 128], sizes = [8, 64], strides = [1, 1]} : vector<8x384xbf16> to vector<8x64xbf16>
    %39 = vector.extract_strided_slice %36 {offsets = [0, 256], sizes = [8, 64], strides = [1, 1]} : vector<8x384xbf16> to vector<8x64xbf16>
    %cst_20 = arith.constant dense<0.000000e+00> : vector<8x8xf32>
    %40 = tpu.matmul %37, %38, %cst_20 {dimension_numbers = #tpu.dot_dimension_numbers<[1], [1], [0], [0], [0, 0, 1, 0], [], []>} : vector<8x64xbf16>, vector<8x64xbf16>, vector<8x8xf32> -> vector<8x8xf32>
    %cst_21 = arith.constant dense<0xFF800000> : vector<8xf32>
    %41 = vector.multi_reduction <maximumf>, %40, %cst_21 [1] : vector<8x8xf32> to vector<8xf32>
    %42 = vector.shape_cast %41 : vector<8xf32> to vector<8x1xf32>
    %43 = vector.broadcast %42 : vector<8x1xf32> to vector<8x8xf32>
    %44 = arith.subf %40, %43 : vector<8x8xf32>
    %45 = math.exp %44 : vector<8x8xf32>
    %cst_22 = arith.constant dense<0.000000e+00> : vector<8xf32>
    %46 = vector.multi_reduction <add>, %45, %cst_22 [1] : vector<8x8xf32> to vector<8xf32>
    %47 = vector.shape_cast %46 : vector<8xf32> to vector<8x1xf32>
    %48 = tpu.reciprocal %47 : vector<8x1xf32> -> vector<8x1xf32>
    %49 = vector.broadcast %48 : vector<8x1xf32> to vector<8x8xf32>
    %50 = arith.mulf %45, %49 : vector<8x8xf32>
    %51 = arith.truncf %50 : vector<8x8xf32> to vector<8x8xbf16>
    %cst_23 = arith.constant dense<0.000000e+00> : vector<8x64xf32>
    %52 = tpu.matmul %51, %39, %cst_23 {dimension_numbers = #tpu.dot_dimension_numbers<[1], [0], [0], [1], [0, 0, 1, 1], [], []>} : vector<8x8xbf16>, vector<8x64xbf16>, vector<8x64xf32> -> vector<8x64xf32>
    %53 = arith.truncf %52 : vector<8x64xf32> to vector<8x64xbf16>
    %54 = vector.extract_strided_slice %36 {offsets = [0, 64], sizes = [8, 64], strides = [1, 1]} : vector<8x384xbf16> to vector<8x64xbf16>
    %55 = vector.extract_strided_slice %36 {offsets = [0, 192], sizes = [8, 64], strides = [1, 1]} : vector<8x384xbf16> to vector<8x64xbf16>
    %56 = vector.extract_strided_slice %36 {offsets = [0, 320], sizes = [8, 64], strides = [1, 1]} : vector<8x384xbf16> to vector<8x64xbf16>
    %cst_24 = arith.constant dense<0.000000e+00> : vector<8x8xf32>
    %57 = tpu.matmul %54, %55, %cst_24 {dimension_numbers = #tpu.dot_dimension_numbers<[1], [1], [0], [0], [0, 0, 1, 0], [], []>} : vector<8x64xbf16>, vector<8x64xbf16>, vector<8x8xf32> -> vector<8x8xf32>
    %cst_25 = arith.constant dense<0xFF800000> : vector<8xf32>
    %58 = vector.multi_reduction <maximumf>, %57, %cst_25 [1] : vector<8x8xf32> to vector<8xf32>
    %59 = vector.shape_cast %58 : vector<8xf32> to vector<8x1xf32>
    %60 = vector.broadcast %59 : vector<8x1xf32> to vector<8x8xf32>
    %61 = arith.subf %57, %60 : vector<8x8xf32>
    %62 = math.exp %61 : vector<8x8xf32>
    %cst_26 = arith.constant dense<0.000000e+00> : vector<8xf32>
    %63 = vector.multi_reduction <add>, %62, %cst_26 [1] : vector<8x8xf32> to vector<8xf32>
    %64 = vector.shape_cast %63 : vector<8xf32> to vector<8x1xf32>
    %65 = tpu.reciprocal %64 : vector<8x1xf32> -> vector<8x1xf32>
    %66 = vector.broadcast %65 : vector<8x1xf32> to vector<8x8xf32>
    %67 = arith.mulf %62, %66 : vector<8x8xf32>
    %68 = arith.truncf %67 : vector<8x8xf32> to vector<8x8xbf16>
    %cst_27 = arith.constant dense<0.000000e+00> : vector<8x64xf32>
    %69 = tpu.matmul %68, %56, %cst_27 {dimension_numbers = #tpu.dot_dimension_numbers<[1], [0], [0], [1], [0, 0, 1, 1], [], []>} : vector<8x8xbf16>, vector<8x64xbf16>, vector<8x64xf32> -> vector<8x64xf32>
    %70 = arith.truncf %69 : vector<8x64xf32> to vector<8x64xbf16>
    %71 = tpu.concatenate %53, %70 in 1 : vector<8x64xbf16>, vector<8x64xbf16> -> vector<8x128xbf16>
    %c0_28 = arith.constant 0 : index
    %c0_29 = arith.constant 0 : index
    %72 = vector.load %arg11[%c0_28, %c0_29] : memref<16x128xbf16, #tpu.memory_space<vmem>>, vector<8x128xbf16>
    tpu.vector_store %arg11[%c0_28, %c0_29], %71 {strides = array<i32>} : memref<16x128xbf16, #tpu.memory_space<vmem>>, vector<8x128xbf16>,
    %c8 = arith.constant 8 : index
    %c0_30 = arith.constant 0 : index
    %73 = vector.load %arg10[%c8, %c0_30] : memref<16x384xbf16, #tpu.memory_space<vmem>>, vector<8x384xbf16>
    %74 = vector.extract_strided_slice %73 {offsets = [0, 0], sizes = [8, 64], strides = [1, 1]} : vector<8x384xbf16> to vector<8x64xbf16>
    %75 = vector.extract_strided_slice %73 {offsets = [0, 128], sizes = [8, 64], strides = [1, 1]} : vector<8x384xbf16> to vector<8x64xbf16>
    %76 = vector.extract_strided_slice %73 {offsets = [0, 256], sizes = [8, 64], strides = [1, 1]} : vector<8x384xbf16> to vector<8x64xbf16>
    %cst_31 = arith.constant dense<0.000000e+00> : vector<8x8xf32>
    %77 = tpu.matmul %74, %75, %cst_31 {dimension_numbers = #tpu.dot_dimension_numbers<[1], [1], [0], [0], [0, 0, 1, 0], [], []>} : vector<8x64xbf16>, vector<8x64xbf16>, vector<8x8xf32> -> vector<8x8xf32>
    %cst_32 = arith.constant dense<0xFF800000> : vector<8xf32>
    %78 = vector.multi_reduction <maximumf>, %77, %cst_32 [1] : vector<8x8xf32> to vector<8xf32>
    %79 = vector.shape_cast %78 : vector<8xf32> to vector<8x1xf32>
    %80 = vector.broadcast %79 : vector<8x1xf32> to vector<8x8xf32>
    %81 = arith.subf %77, %80 : vector<8x8xf32>
    %82 = math.exp %81 : vector<8x8xf32>
    %cst_33 = arith.constant dense<0.000000e+00> : vector<8xf32>
    %83 = vector.multi_reduction <add>, %82, %cst_33 [1] : vector<8x8xf32> to vector<8xf32>
    %84 = vector.shape_cast %83 : vector<8xf32> to vector<8x1xf32>
    %85 = tpu.reciprocal %84 : vector<8x1xf32> -> vector<8x1xf32>
    %86 = vector.broadcast %85 : vector<8x1xf32> to vector<8x8xf32>
    %87 = arith.mulf %82, %86 : vector<8x8xf32>
    %88 = arith.truncf %87 : vector<8x8xf32> to vector<8x8xbf16>
    %cst_34 = arith.constant dense<0.000000e+00> : vector<8x64xf32>
    %89 = tpu.matmul %88, %76, %cst_34 {dimension_numbers = #tpu.dot_dimension_numbers<[1], [0], [0], [1], [0, 0, 1, 1], [], []>} : vector<8x8xbf16>, vector<8x64xbf16>, vector<8x64xf32> -> vector<8x64xf32>
    %90 = arith.truncf %89 : vector<8x64xf32> to vector<8x64xbf16>
    %91 = vector.extract_strided_slice %73 {offsets = [0, 64], sizes = [8, 64], strides = [1, 1]} : vector<8x384xbf16> to vector<8x64xbf16>
    %92 = vector.extract_strided_slice %73 {offsets = [0, 192], sizes = [8, 64], strides = [1, 1]} : vector<8x384xbf16> to vector<8x64xbf16>
    %93 = vector.extract_strided_slice %73 {offsets = [0, 320], sizes = [8, 64], strides = [1, 1]} : vector<8x384xbf16> to vector<8x64xbf16>
    %cst_35 = arith.constant dense<0.000000e+00> : vector<8x8xf32>
    %94 = tpu.matmul %91, %92, %cst_35 {dimension_numbers = #tpu.dot_dimension_numbers<[1], [1], [0], [0], [0, 0, 1, 0], [], []>} : vector<8x64xbf16>, vector<8x64xbf16>, vector<8x8xf32> -> vector<8x8xf32>
    %cst_36 = arith.constant dense<0xFF800000> : vector<8xf32>
    %95 = vector.multi_reduction <maximumf>, %94, %cst_36 [1] : vector<8x8xf32> to vector<8xf32>
    %96 = vector.shape_cast %95 : vector<8xf32> to vector<8x1xf32>
    %97 = vector.broadcast %96 : vector<8x1xf32> to vector<8x8xf32>
    %98 = arith.subf %94, %97 : vector<8x8xf32>
    %99 = math.exp %98 : vector<8x8xf32>
    %cst_37 = arith.constant dense<0.000000e+00> : vector<8xf32>
    %100 = vector.multi_reduction <add>, %99, %cst_37 [1] : vector<8x8xf32> to vector<8xf32>
    %101 = vector.shape_cast %100 : vector<8xf32> to vector<8x1xf32>
    %102 = tpu.reciprocal %101 : vector<8x1xf32> -> vector<8x1xf32>
    %103 = vector.broadcast %102 : vector<8x1xf32> to vector<8x8xf32>
    %104 = arith.mulf %99, %103 : vector<8x8xf32>
    %105 = arith.truncf %104 : vector<8x8xf32> to vector<8x8xbf16>
    %cst_38 = arith.constant dense<0.000000e+00> : vector<8x64xf32>
    %106 = tpu.matmul %105, %93, %cst_38 {dimension_numbers = #tpu.dot_dimension_numbers<[1], [0], [0], [1], [0, 0, 1, 1], [], []>} : vector<8x8xbf16>, vector<8x64xbf16>, vector<8x64xf32> -> vector<8x64xf32>
    %107 = arith.truncf %106 : vector<8x64xf32> to vector<8x64xbf16>
    %108 = tpu.concatenate %90, %107 in 1 : vector<8x64xbf16>, vector<8x64xbf16> -> vector<8x128xbf16>
    %c8_39 = arith.constant 8 : index
    %c0_40 = arith.constant 0 : index
    %109 = vector.load %arg11[%c8_39, %c0_40] : memref<16x128xbf16, #tpu.memory_space<vmem>>, vector<8x128xbf16>
    tpu.vector_store %arg11[%c8_39, %c0_40], %108 {strides = array<i32>} : memref<16x128xbf16, #tpu.memory_space<vmem>>, vector<8x128xbf16>,
    %c0_41 = arith.constant 0 : index
    %c0_42 = arith.constant 0 : index
    %110 = vector.load %arg11[%c0_41, %c0_42] : memref<16x128xbf16, #tpu.memory_space<vmem>>, vector<16x128xbf16>
    %c0_43 = arith.constant 0 : index
    %c0_44 = arith.constant 0 : index
    %c0_45 = arith.constant 0 : index
    %111 = vector.load %arg6[%c0_43, %c0_44, %c0_45] : memref<1x128x128xbf16, #tpu.memory_space<vmem>>, vector<1x128x128xbf16>
    %112 = vector.shape_cast %111 : vector<1x128x128xbf16> to vector<128x128xbf16>
    %cst_46 = arith.constant dense<0.000000e+00> : vector<16x128xf32>
    %113 = tpu.matmul %110, %112, %cst_46 {dimension_numbers = #tpu.dot_dimension_numbers<[1], [0], [0], [1], [0, 0, 1, 1], [], []>} : vector<16x128xbf16>, vector<128x128xbf16>, vector<16x128xf32> -> vector<16x128xf32>
    %cst_47 = arith.constant 5.000000e-01 : f32
    %114 = vector.broadcast %cst_47 : f32 to vector<16x128xf32>
    %115 = arith.mulf %114, %113 : vector<16x128xf32>
    %cst_48 = arith.constant 5.000000e-01 : f32
    %116 = vector.broadcast %cst_48 : f32 to vector<16x128xf32>
    %117 = arith.mulf %116, %3 : vector<16x128xf32>
    %118 = arith.addf %115, %117 : vector<16x128xf32>
    %119 = arith.truncf %118 : vector<16x128xf32> to vector<16x128xbf16>
    %c0_49 = arith.constant 0 : index
    %c0_50 = arith.constant 0 : index
    %c0_51 = arith.constant 0 : index
    %120 = vector.load %arg7[%c0_49, %c0_50, %c0_51] : memref<1x128x128xbf16, #tpu.memory_space<vmem>>, vector<1x128x128xbf16>
    %121 = vector.shape_cast %120 : vector<1x128x128xbf16> to vector<128x128xbf16>
    %cst_52 = arith.constant dense<0.000000e+00> : vector<16x128xf32>
    %122 = tpu.matmul %119, %121, %cst_52 {dimension_numbers = #tpu.dot_dimension_numbers<[1], [0], [0], [1], [0, 0, 1, 1], [], []>} : vector<16x128xbf16>, vector<128x128xbf16>, vector<16x128xf32> -> vector<16x128xf32>
    %c0_53 = arith.constant 0 : index
    %c0_54 = arith.constant 0 : index
    %c0_55 = arith.constant 0 : index
    %123 = vector.load %arg8[%c0_53, %c0_54, %c0_55] : memref<1x1x128xf32, #tpu.memory_space<vmem>>, vector<1x1x128xf32>
    %124 = vector.shape_cast %123 : vector<1x1x128xf32> to vector<1x128xf32>
    %125 = vector.broadcast %124 : vector<1x128xf32> to vector<16x128xf32>
    %126 = arith.addf %122, %125 : vector<16x128xf32>
    %cst_56 = arith.constant 5.000000e-01 : f32
    %127 = vector.broadcast %cst_56 : f32 to vector<16x128xf32>
    %128 = arith.mulf %127, %126 : vector<16x128xf32>
    %cst_57 = arith.constant 5.000000e-01 : f32
    %129 = vector.broadcast %cst_57 : f32 to vector<16x128xf32>
    %130 = arith.mulf %129, %118 : vector<16x128xf32>
    %131 = arith.addf %128, %130 : vector<16x128xf32>
    %c0_58 = arith.constant 0 : index
    %c0_59 = arith.constant 0 : index
    %132 = vector.load %arg9[%c0_58, %c0_59] : memref<16x128xf32, #tpu.memory_space<vmem>>, vector<16x128xf32>
    tpu.vector_store %arg9[%c0_58, %c0_59], %131 {strides = array<i32>} : memref<16x128xf32, #tpu.memory_space<vmem>>, vector<16x128xf32>,
    return
  }
  func.func @transform_0(%arg0: i32, %arg1: i32) -> (i32, i32) {
    %c0_i32 = arith.constant 0 : i32
    %c0_i32_0 = arith.constant 0 : i32
    return %arg0, %c0_i32 : i32, i32
  }
  func.func @transform_1(%arg0: i32, %arg1: i32) -> (i32, i32, i32) {
    %c0_i32 = arith.constant 0 : i32
    %c0_i32_0 = arith.constant 0 : i32
    %c0_i32_1 = arith.constant 0 : i32
    return %arg1, %c0_i32, %c0_i32_0 : i32, i32, i32
  }
  func.func @transform_2(%arg0: i32, %arg1: i32) -> (i32, i32, i32) {
    %c0_i32 = arith.constant 0 : i32
    %c0_i32_0 = arith.constant 0 : i32
    %c0_i32_1 = arith.constant 0 : i32
    return %arg1, %c0_i32, %c0_i32_0 : i32, i32, i32
  }
  func.func @transform_3(%arg0: i32, %arg1: i32) -> (i32, i32, i32) {
    %c0_i32 = arith.constant 0 : i32
    %c0_i32_0 = arith.constant 0 : i32
    %c0_i32_1 = arith.constant 0 : i32
    return %arg1, %c0_i32, %c0_i32_0 : i32, i32, i32
  }
  func.func @transform_4(%arg0: i32, %arg1: i32) -> (i32, i32, i32) {
    %c0_i32 = arith.constant 0 : i32
    %c0_i32_0 = arith.constant 0 : i32
    %c0_i32_1 = arith.constant 0 : i32
    return %arg1, %c0_i32, %c0_i32_0 : i32, i32, i32
  }
  func.func @transform_5(%arg0: i32, %arg1: i32) -> (i32, i32, i32) {
    %c0_i32 = arith.constant 0 : i32
    %c0_i32_0 = arith.constant 0 : i32
    %c0_i32_1 = arith.constant 0 : i32
    return %arg1, %c0_i32, %c0_i32_0 : i32, i32, i32
  }
  func.func @transform_6(%arg0: i32, %arg1: i32) -> (i32, i32, i32) {
    %c0_i32 = arith.constant 0 : i32
    %c0_i32_0 = arith.constant 0 : i32
    %c0_i32_1 = arith.constant 0 : i32
    return %arg1, %c0_i32, %c0_i32_0 : i32, i32, i32
  }
  func.func @transform_7(%arg0: i32, %arg1: i32) -> (i32, i32) {
    %c0_i32 = arith.constant 0 : i32
    %c0_i32_0 = arith.constant 0 : i32
    return %arg0, %c0_i32 : i32, i32
  }
}

</mosaic_0001>

<llo_original>
// kernel: tpu_custom_call.1
$region0: #{tpu_custom_call.1}
  #allocation0 [shape = 'u32[]', space=smem, size = 0x4, offset = 0x4, fixed_abs, tag = 'smem constant byte address 0x4 - core index']
  #allocation1 [shape = 'u32[72,128]{1,0:T(1,128)}', space=vmem, size = 0x9000, scoped, tag = 'internal scratch']
  #allocation2 [shape = 'bf16[16,384]{1,0:T(8,128)(2,1)}', space=vmem, size = 0x3000, scoped, tag = 'scratch operand']
  #allocation3 [shape = 'bf16[16,128]{1,0:T(8,128)(2,1)}', space=vmem, size = 0x1000, scoped, tag = 'scratch operand']
  %s0 = inlined_call_operand.hbm [shape: f32[16,128], index: 0, kind: input, shape index: {}]
  %s1 = inlined_call_operand.hbm [shape: f32[2,1,128], index: 1, kind: input, shape index: {}]
  %s2 = inlined_call_operand.hbm [shape: f32[2,1,128], index: 2, kind: input, shape index: {}]
  %s3 = inlined_call_operand.hbm [shape: bf16[2,128,384], index: 3, kind: input, shape index: {}]
  %s4 = inlined_call_operand.hbm [shape: bf16[2,128,128], index: 4, kind: input, shape index: {}]
  %s5 = inlined_call_operand.hbm [shape: bf16[2,128,128], index: 5, kind: input, shape index: {}]
  %s6 = inlined_call_operand.vmem [shape: f32[2,1,128], index: 6, kind: input, shape index: {}]
  %s7 = inlined_call_operand.hbm [shape: f32[16,128], index: 7, kind: output, shape index: {}]
  %s8 = sld [smem:[#allocation0]]
  $region89: #{tpu_custom_call.1} parent=0
    _
  %s10 = ssub.s32 1, %s8
  %s11 = scalar_select 0, %s10, %s8
  $region1: #{tpu_custom_call.1} parent=0
    #allocation4 [shape = 'u8[8192]{0}', space=vmem, size = 0x2000, scoped, tag = 'input window, operand 0, single buffered']
    #allocation5 [shape = 's32[2]{0}', space=sflag, size = 0x8, scoped, tag = 'scoped memory for tpu_custom_call.1']
    #allocation6 [shape = 's32[2]{0}', space=sflag, size = 0x8, scoped, tag = 'scoped memory for tpu_custom_call.1']
    #allocation7 [shape = 'u8[1024]{0}', space=vmem, size = 0x400, scoped, tag = 'input window, operand 1']
    #allocation8 [shape = 's32[2]{0}', space=sflag, size = 0x8, scoped, tag = 'scoped memory for tpu_custom_call.1']
    #allocation9 [shape = 'u8[1024]{0}', space=vmem, size = 0x400, scoped, tag = 'input window, operand 2']
    #allocation10 [shape = 'u8[196608]{0}', space=vmem, size = 0x30000, scoped, tag = 'input window, operand 3']
    #allocation11 [shape = 's32[2]{0}', space=sflag, size = 0x8, scoped, tag = 'scoped memory for tpu_custom_call.1']
    #allocation12 [shape = 'u8[65536]{0}', space=vmem, size = 0x10000, scoped, tag = 'input window, operand 4']
    #allocation13 [shape = 'u8[65536]{0}', space=vmem, size = 0x10000, scoped, tag = 'input window, operand 5']
    #allocation14 [shape = 's32[2]{0}', space=sflag, size = 0x8, scoped, tag = 'scoped memory for tpu_custom_call.1']
    #allocation15 [shape = 'u8[8192]{0}', space=vmem, size = 0x2000, scoped, tag = 'output window, operand 0, single buffered']
    %12 = vsyncpa [#allocation5], 0
    %13 = vsyncpa [#allocation8], 0
    %s14 = scalar_lea.sflag [#allocation8], 1
    %15 = vsyncpa %s14, 0
    %16 = vsyncpa [#allocation11], 0
    %s17 = scalar_lea.sflag [#allocation11], 1
    %18 = vsyncpa %s17, 0
    %19 = vsyncpa [#allocation14], 0
    %s20 = scalar_lea.sflag [#allocation14], 1
    %21 = vsyncpa %s20, 0
    %22 = vsyncpa [#allocation6], 0
    loop: start=0, step=1, limit=4
    $region2: #{tpu_custom_call.1} parent=1 // loop_pre_header
      _
    $region3: #{tpu_custom_call.1} parent=1 // loop_header
      %s24 = sphi 0, %s28
      %p25 = scmp.ge.s32.totalorder %s24, 4
      %s31 = sphi 0, %s43
      %s32 = sphi 0, %s39
      %s33 = sphi 0, %s31
      %s34 = sphi 0, %s32
      %s35 = sphi 0, %s33
      %s36 = sphi 0, %s34
      %s46 = sphi 0, %s48
      %s49 = sphi 0, %s46
      %s50 = sphi 0, %s49
      %s66 = sphi 0, %s50
      %s72 = sphi 0, %s74
      %s75 = sphi 0, %s72
      %s76 = sphi 0, %s75
      %s92 = sphi 0, %s76
      %s98 = sphi 0, %s100
      %s101 = sphi 0, %s98
      %s102 = sphi 0, %s101
      %s118 = sphi 0, %s102
      %s124 = sphi 0, %s126
      %s127 = sphi 0, %s124
      %s128 = sphi 0, %s127
      %s144 = sphi 0, %s128
      %s150 = sphi 0, %s152
      %s153 = sphi 0, %s150
      %s154 = sphi 0, %s153
      %s170 = sphi 0, %s154
      %s176 = sphi 0, %s178
      %s179 = sphi 0, %s176
      %s180 = sphi 0, %s179
      %s196 = sphi 0, %s180
      %s202 = sphi 0, %s204
      %s205 = sphi 0, %s202
      %s206 = sphi 0, %s205
      %s222 = sphi 0, %s206
      %s228 = sphi 0, %s230
      %s231 = sphi 0, %s228
      %s232 = sphi 0, %s231
      %s248 = sphi 0, %s232
    $region4: #{tpu_custom_call.1} parent=1 // loop_header_branch
      %27 = sbr.rel (%p25) target = $region8
    $region5: #{tpu_custom_call.1} parent=1 // loop_body
      %s29 = ssub.s32 %s24, 1
      %s30 = ssub.s32 %s24, 2
      %s37 = sadd.s32 1, %s32
      %p38 = scmp.ge.s32.totalorder %s37, 2
      %s39 = scalar_select %p38, 0, %s37
      %s40 = sadd.s32 1, %s31
      %s41 = scalar_select %p38, %s40, %s31
      %p42 = scmp.ge.s32.totalorder %s41, 1
      %s43 = scalar_select %p42, 0, %s41
      %s44 = ssub.s32 %s31, %s43
      %p45 = scmp.eq.s32.totalorder %s44, 0
      %s47 = sadd.s32 %s46, 1
      %s48 = scalar_select %p45, %s46, %s47
      %p51 = pneg %p45
      %p52 = scmp.eq.s32.totalorder %s24, 1
      %p53 = por %p51, %p52
      %p54 = scmp.ne.s32.totalorder %s46, %s49
      %p55 = scmp.eq.s32.totalorder %s24, 0
      %p56 = por %p54, %p55
      %p57 = scmp.ne.s32.totalorder %s46, %s49
      %p58 = scmp.eq.s32.totalorder %s29, 1
      %p59 = por %p57, %p58
      %p60 = scmp.ne.s32.totalorder %s49, %s50
      %p61 = scmp.eq.s32.totalorder %s29, 0
      %p62 = por %p60, %p61
      %p63 = scmp.ne.s32.totalorder %s49, %s50
      %p64 = scmp.eq.s32.totalorder %s30, 1
      %p65 = por %p63, %p64
      %p67 = scmp.ne.s32.totalorder %s50, %s66
      %p68 = scmp.eq.s32.totalorder %s30, 0
      %p69 = por %p67, %p68
      %s70 = ssub.s32 %s32, %s39
      %p71 = scmp.eq.s32.totalorder %s70, 0
      %s73 = sadd.s32 %s72, 1
      %s74 = scalar_select %p71, %s72, %s73
      %p77 = pneg %p71
      %p78 = scmp.eq.s32.totalorder %s24, 1
      %p79 = por %p77, %p78
      %p80 = scmp.ne.s32.totalorder %s72, %s75
      %p81 = scmp.eq.s32.totalorder %s24, 0
      %p82 = por %p80, %p81
      %p83 = scmp.ne.s32.totalorder %s72, %s75
      %p84 = scmp.eq.s32.totalorder %s29, 1
      %p85 = por %p83, %p84
      %p86 = scmp.ne.s32.totalorder %s75, %s76
      %p87 = scmp.eq.s32.totalorder %s29, 0
      %p88 = por %p86, %p87
      %p89 = scmp.ne.s32.totalorder %s75, %s76
      %p90 = scmp.eq.s32.totalorder %s30, 1
      %p91 = por %p89, %p90
      %p93 = scmp.ne.s32.totalorder %s76, %s92
      %p94 = scmp.eq.s32.totalorder %s30, 0
      %p95 = por %p93, %p94
      %s96 = ssub.s32 %s32, %s39
      %p97 = scmp.eq.s32.totalorder %s96, 0
      %s99 = sadd.s32 %s98, 1
      %s100 = scalar_select %p97, %s98, %s99
      %p103 = pneg %p97
      %p104 = scmp.eq.s32.totalorder %s24, 1
      %p105 = por %p103, %p104
      %p106 = scmp.ne.s32.totalorder %s98, %s101
      %p107 = scmp.eq.s32.totalorder %s24, 0
      %p108 = por %p106, %p107
      %p109 = scmp.ne.s32.totalorder %s98, %s101
      %p110 = scmp.eq.s32.totalorder %s29, 1
      %p111 = por %p109, %p110
      %p112 = scmp.ne.s32.totalorder %s101, %s102
      %p113 = scmp.eq.s32.totalorder %s29, 0
      %p114 = por %p112, %p113
      %p115 = scmp.ne.s32.totalorder %s101, %s102
      %p116 = scmp.eq.s32.totalorder %s30, 1
      %p117 = por %p115, %p116
      %p119 = scmp.ne.s32.totalorder %s102, %s118
      %p120 = scmp.eq.s32.totalorder %s30, 0
      %p121 = por %p119, %p120
      %s122 = ssub.s32 %s32, %s39
      %p123 = scmp.eq.s32.totalorder %s122, 0
      %s125 = sadd.s32 %s124, 1
      %s126 = scalar_select %p123, %s124, %s125
      %p129 = pneg %p123
      %p130 = scmp.eq.s32.totalorder %s24, 1
      %p131 = por %p129, %p130
      %p132 = scmp.ne.s32.totalorder %s124, %s127
      %p133 = scmp.eq.s32.totalorder %s24, 0
      %p134 = por %p132, %p133
      %p135 = scmp.ne.s32.totalorder %s124, %s127
      %p136 = scmp.eq.s32.totalorder %s29, 1
      %p137 = por %p135, %p136
      %p138 = scmp.ne.s32.totalorder %s127, %s128
      %p139 = scmp.eq.s32.totalorder %s29, 0
      %p140 = por %p138, %p139
      %p141 = scmp.ne.s32.totalorder %s127, %s128
      %p142 = scmp.eq.s32.totalorder %s30, 1
      %p143 = por %p141, %p142
      %p145 = scmp.ne.s32.totalorder %s128, %s144
      %p146 = scmp.eq.s32.totalorder %s30, 0
      %p147 = por %p145, %p146
      %s148 = ssub.s32 %s32, %s39
      %p149 = scmp.eq.s32.totalorder %s148, 0
      %s151 = sadd.s32 %s150, 1
      %s152 = scalar_select %p149, %s150, %s151
      %p155 = pneg %p149
      %p156 = scmp.eq.s32.totalorder %s24, 1
      %p157 = por %p155, %p156
      %p158 = scmp.ne.s32.totalorder %s150, %s153
      %p159 = scmp.eq.s32.totalorder %s24, 0
      %p160 = por %p158, %p159
      %p161 = scmp.ne.s32.totalorder %s150, %s153
      %p162 = scmp.eq.s32.totalorder %s29, 1
      %p163 = por %p161, %p162
      %p164 = scmp.ne.s32.totalorder %s153, %s154
      %p165 = scmp.eq.s32.totalorder %s29, 0
      %p166 = por %p164, %p165
      %p167 = scmp.ne.s32.totalorder %s153, %s154
      %p168 = scmp.eq.s32.totalorder %s30, 1
      %p169 = por %p167, %p168
      %p171 = scmp.ne.s32.totalorder %s154, %s170
      %p172 = scmp.eq.s32.totalorder %s30, 0
      %p173 = por %p171, %p172
      %s174 = ssub.s32 %s32, %s39
      %p175 = scmp.eq.s32.totalorder %s174, 0
      %s177 = sadd.s32 %s176, 1
      %s178 = scalar_select %p175, %s176, %s177
      %p181 = pneg %p175
      %p182 = scmp.eq.s32.totalorder %s24, 1
      %p183 = por %p181, %p182
      %p184 = scmp.ne.s32.totalorder %s176, %s179
      %p185 = scmp.eq.s32.totalorder %s24, 0
      %p186 = por %p184, %p185
      %p187 = scmp.ne.s32.totalorder %s176, %s179
      %p188 = scmp.eq.s32.totalorder %s29, 1
      %p189 = por %p187, %p188
      %p190 = scmp.ne.s32.totalorder %s179, %s180
      %p191 = scmp.eq.s32.totalorder %s29, 0
      %p192 = por %p190, %p191
      %p193 = scmp.ne.s32.totalorder %s179, %s180
      %p194 = scmp.eq.s32.totalorder %s30, 1
      %p195 = por %p193, %p194
      %p197 = scmp.ne.s32.totalorder %s180, %s196
      %p198 = scmp.eq.s32.totalorder %s30, 0
      %p199 = por %p197, %p198
      %s200 = ssub.s32 %s32, %s39
      %p201 = scmp.eq.s32.totalorder %s200, 0
      %s203 = sadd.s32 %s202, 1
      %s204 = scalar_select %p201, %s202, %s203
      %p207 = pneg %p201
      %p208 = scmp.eq.s32.totalorder %s24, 1
      %p209 = por %p207, %p208
      %p210 = scmp.ne.s32.totalorder %s202, %s205
      %p211 = scmp.eq.s32.totalorder %s24, 0
      %p212 = por %p210, %p211
      %p213 = scmp.ne.s32.totalorder %s202, %s205
      %p214 = scmp.eq.s32.totalorder %s29, 1
      %p215 = por %p213, %p214
      %p216 = scmp.ne.s32.totalorder %s205, %s206
      %p217 = scmp.eq.s32.totalorder %s29, 0
      %p218 = por %p216, %p217
      %p219 = scmp.ne.s32.totalorder %s205, %s206
      %p220 = scmp.eq.s32.totalorder %s30, 1
      %p221 = por %p219, %p220
      %p223 = scmp.ne.s32.totalorder %s206, %s222
      %p224 = scmp.eq.s32.totalorder %s30, 0
      %p225 = por %p223, %p224
      %s226 = ssub.s32 %s31, %s43
      %p227 = scmp.eq.s32.totalorder %s226, 0
      %s229 = sadd.s32 %s228, 1
      %s230 = scalar_select %p227, %s228, %s229
      %p233 = pneg %p227
      %p234 = scmp.eq.s32.totalorder %s24, 1
      %p235 = por %p233, %p234
      %p236 = scmp.ne.s32.totalorder %s228, %s231
      %p237 = scmp.eq.s32.totalorder %s24, 0
      %p238 = por %p236, %p237
      %p239 = scmp.ne.s32.totalorder %s228, %s231
      %p240 = scmp.eq.s32.totalorder %s29, 1
      %p241 = por %p239, %p240
      %p242 = scmp.ne.s32.totalorder %s231, %s232
      %p243 = scmp.eq.s32.totalorder %s29, 0
      %p244 = por %p242, %p243
      %p245 = scmp.ne.s32.totalorder %s231, %s232
      %p246 = scmp.eq.s32.totalorder %s30, 1
      %p247 = por %p245, %p246
      %p249 = scmp.ne.s32.totalorder %s232, %s248
      %p250 = scmp.eq.s32.totalorder %s30, 0
      %p251 = por %p249, %p250
      %p252 = scmp.le.s32.totalorder 1, %s24
      %p253 = scmp.lt.s32.totalorder %s24, 3
      %p254 = pnand %p252, %p253
      %p255 = pneg %p254
      // Predicated region
      $region9: #{tpu_custom_call.1} parent=5 // pred_check
        _
      $region10: #{tpu_custom_call.1} parent=5 // pred_check_branch
        %257 = sbr.rel (%p254) target = $region12
      $region11: #{tpu_custom_call.1} parent=5 // pred_region
        %s258 = ssub.s32 %s24, 1
        // Predicated region
        $region13: #{tpu_custom_call.1} parent=11 // pred_check
          %p259 = pneg %p62
        $region14: #{tpu_custom_call.1} parent=11 // pred_check_branch
          %261 = sbr.rel (%p259) target = $region16
        $region15: #{tpu_custom_call.1} parent=11 // pred_region
          %s262 = smul.u32 2, %s33
          %264 = vsyncadd [#allocation5], 0
          %s265 = smul.addr %s262, 8
          %s266 = scalar_lea.hbm %s0, %s265
          %s267 = sshll.u32 %s266, 4
          %s268 = int_to_ptr.hbm [resolvable:$true] %s267
          %s269 = sshll.u32 [#allocation4], 4
          %s270 = int_to_ptr.vmem [resolvable:$true] %s269
          %275 = dma.hbm_to_vmem [thread:$0]  %s268, 256, %s270, [#allocation5], 128, 128, 8
        $region16: #{tpu_custom_call.1} parent=11 // pred_fallthru
          _
      $region12: #{tpu_custom_call.1} parent=5 // pred_fallthru
        _
      %p276 = scmp.lt.s32.totalorder %s24, 2
      // Predicated region
      $region17: #{tpu_custom_call.1} parent=5 // pred_check
        %p277 = pneg %p276
      $region18: #{tpu_custom_call.1} parent=5 // pred_check_branch
        %279 = sbr.rel (%p277) target = $region20
      $region19: #{tpu_custom_call.1} parent=5 // pred_region
        // Predicated region
        $region21: #{tpu_custom_call.1} parent=19 // pred_check
          %p280 = pneg %p82
        $region22: #{tpu_custom_call.1} parent=19 // pred_check_branch
          %282 = sbr.rel (%p280) target = $region24
        $region23: #{tpu_custom_call.1} parent=19 // pred_region
          %s283 = sand.u32 %s24, 1
          %s284 = scalar_lea.sflag [#allocation8], %s283
          %s285 = sand.u32 %s72, 1
          %s286 = scalar_lea.vmem [#allocation7], %s285
          %288 = vsyncadd %s284, 0
          %s289 = scalar_lea.hbm %s1, %s32
          %s291 = sshll.u32 %s289, 4
          %s292 = int_to_ptr.hbm [resolvable:$true] %s291
          %s293 = sshll.u32 %s286, 4
          %s294 = int_to_ptr.vmem [resolvable:$true] %s293
          %296 = dma.hbm_to_vmem [thread:$0]  %s292, 16, %s294, %s284
        $region24: #{tpu_custom_call.1} parent=19 // pred_fallthru
          _
        // Predicated region
        $region25: #{tpu_custom_call.1} parent=19 // pred_check
          %p297 = pneg %p108
        $region26: #{tpu_custom_call.1} parent=19 // pred_check_branch
          %299 = sbr.rel (%p297) target = $region28
        $region27: #{tpu_custom_call.1} parent=19 // pred_region
          %s300 = sand.u32 %s24, 1
          %s301 = scalar_lea.sflag [#allocation8], %s300
          %s302 = sand.u32 %s98, 1
          %s303 = scalar_lea.vmem [#allocation9], %s302
          %305 = vsyncadd %s301, 0
          %s306 = scalar_lea.hbm %s2, %s32
          %s308 = sshll.u32 %s306, 4
          %s309 = int_to_ptr.hbm [resolvable:$true] %s308
          %s310 = sshll.u32 %s303, 4
          %s311 = int_to_ptr.vmem [resolvable:$true] %s310
          %313 = dma.hbm_to_vmem [thread:$0]  %s309, 16, %s311, %s301
        $region28: #{tpu_custom_call.1} parent=19 // pred_fallthru
          _
        // Predicated region
        $region29: #{tpu_custom_call.1} parent=19 // pred_check
          %p314 = pneg %p134
        $region30: #{tpu_custom_call.1} parent=19 // pred_check_branch
          %316 = sbr.rel (%p314) target = $region32
        $region31: #{tpu_custom_call.1} parent=19 // pred_region
          %s317 = sand.u32 %s24, 1
          %s318 = scalar_lea.sflag [#allocation11], %s317
          %s319 = sand.u32 %s124, 1
          %s320 = smul.addr %s319, 192
          %s321 = scalar_lea.vmem [#allocation10], %s320
          %323 = vsyncadd %s318, 0
          %s324 = smul.addr %s32, 48
          %s325 = smul.addr %s324, 4
          %s326 = scalar_lea.hbm %s3, %s325
          %s327 = sshll.u32 %s326, 4
          %s328 = int_to_ptr.hbm [resolvable:$true] %s327
          %s329 = sshll.u32 %s321, 4
          %s330 = int_to_ptr.vmem [resolvable:$true] %s329
          %335 = dma.hbm_to_vmem [thread:$0]  %s328, 3072, %s330, %s318, 192, 192, 12
        $region32: #{tpu_custom_call.1} parent=19 // pred_fallthru
          _
        // Predicated region
        $region33: #{tpu_custom_call.1} parent=19 // pred_check
          %p336 = pneg %p160
        $region34: #{tpu_custom_call.1} parent=19 // pred_check_branch
          %338 = sbr.rel (%p336) target = $region36
        $region35: #{tpu_custom_call.1} parent=19 // pred_region
          %s339 = sand.u32 %s24, 1
          %s340 = scalar_lea.sflag [#allocation11], %s339
          %s341 = sand.u32 %s150, 1
          %s342 = smul.addr %s341, 64
          %s343 = scalar_lea.vmem [#allocation12], %s342
          %345 = vsyncadd %s340, 0
          %s346 = smul.addr %s32, 16
          %s347 = smul.addr %s346, 4
          %s348 = scalar_lea.hbm %s4, %s347
          %s349 = sshll.u32 %s348, 4
          %s350 = int_to_ptr.hbm [resolvable:$true] %s349
          %s351 = sshll.u32 %s343, 4
          %s352 = int_to_ptr.vmem [resolvable:$true] %s351
          %357 = dma.hbm_to_vmem [thread:$0]  %s350, 1024, %s352, %s340, 64, 64, 4
        $region36: #{tpu_custom_call.1} parent=19 // pred_fallthru
          _
        // Predicated region
        $region37: #{tpu_custom_call.1} parent=19 // pred_check
          %p358 = pneg %p186
        $region38: #{tpu_custom_call.1} parent=19 // pred_check_branch
          %360 = sbr.rel (%p358) target = $region40
        $region39: #{tpu_custom_call.1} parent=19 // pred_region
          %s361 = sand.u32 %s176, 1
          %s362 = scalar_lea.sflag [#allocation14], %s361
          %s363 = sand.u32 %s176, 1
          %s364 = smul.addr %s363, 64
          %s365 = scalar_lea.vmem [#allocation13], %s364
          %367 = vsyncadd %s362, 0
          %s368 = smul.addr %s32, 16
          %s369 = smul.addr %s368, 4
          %s370 = scalar_lea.hbm %s5, %s369
          %s371 = sshll.u32 %s370, 4
          %s372 = int_to_ptr.hbm [resolvable:$true] %s371
          %s373 = sshll.u32 %s365, 4
          %s374 = int_to_ptr.vmem [resolvable:$true] %s373
          %379 = dma.hbm_to_vmem [thread:$0]  %s372, 1024, %s374, %s362, 64, 64, 4
        $region40: #{tpu_custom_call.1} parent=19 // pred_fallthru
          _
        // Predicated region
        $region41: #{tpu_custom_call.1} parent=19 // pred_check
          %p380 = pneg %p212
        $region42: #{tpu_custom_call.1} parent=19 // pred_check_branch
          %382 = sbr.rel (%p380) target = $region44
        $region43: #{tpu_custom_call.1} parent=19 // pred_region
          %p383 = scmp.lt.s32.totalorder %s32, 1
          %s384 = scalar_select %p383, %s32, 1
          %s385 = scalar_lea.vmem %s6, %s384
        $region44: #{tpu_custom_call.1} parent=19 // pred_fallthru
          _
      $region20: #{tpu_custom_call.1} parent=5 // pred_fallthru
        _
      %p386 = scmp.le.s32.totalorder 1, %s24
      %p387 = scmp.lt.s32.totalorder %s24, 3
      %p388 = pnand %p386, %p387
      %p389 = pneg %p388
      // Predicated region
      $region45: #{tpu_custom_call.1} parent=5 // pred_check
        _
      $region46: #{tpu_custom_call.1} parent=5 // pred_check_branch
        %391 = sbr.rel (%p388) target = $region48
      $region47: #{tpu_custom_call.1} parent=5 // pred_region
        %s392 = ssub.s32 %s24, 1
        // Predicated region
        $region49: #{tpu_custom_call.1} parent=47 // pred_check
          %p393 = pneg %p62
        $region50: #{tpu_custom_call.1} parent=47 // pred_check_branch
          %395 = sbr.rel (%p393) target = $region52
        $region51: #{tpu_custom_call.1} parent=47 // pred_region
          %397 = dma.done [#allocation5], 256
        $region52: #{tpu_custom_call.1} parent=47 // pred_fallthru
          _
        %s398 = sand.u32 %s29, 1
        %s399 = scalar_lea.sflag [#allocation8], %s398
        %s400 = sand.u32 %s75, 1
        %s401 = scalar_lea.vmem [#allocation7], %s400
        // Predicated region
        $region53: #{tpu_custom_call.1} parent=47 // pred_check
          %p402 = pneg %p88
        $region54: #{tpu_custom_call.1} parent=47 // pred_check_branch
          %404 = sbr.rel (%p402) target = $region56
        $region55: #{tpu_custom_call.1} parent=47 // pred_region
          %406 = dma.done %s399, 16
        $region56: #{tpu_custom_call.1} parent=47 // pred_fallthru
          _
        %s407 = sand.u32 %s29, 1
        %s408 = scalar_lea.sflag [#allocation8], %s407
        %s409 = sand.u32 %s101, 1
        %s410 = scalar_lea.vmem [#allocation9], %s409
        // Predicated region
        $region57: #{tpu_custom_call.1} parent=47 // pred_check
          %p411 = pneg %p114
        $region58: #{tpu_custom_call.1} parent=47 // pred_check_branch
          %413 = sbr.rel (%p411) target = $region60
        $region59: #{tpu_custom_call.1} parent=47 // pred_region
          %415 = dma.done %s408, 16
        $region60: #{tpu_custom_call.1} parent=47 // pred_fallthru
          _
        %s416 = sand.u32 %s29, 1
        %s417 = scalar_lea.sflag [#allocation11], %s416
        %s418 = sand.u32 %s127, 1
        %s419 = smul.addr %s418, 192
        %s420 = scalar_lea.vmem [#allocation10], %s419
        // Predicated region
        $region61: #{tpu_custom_call.1} parent=47 // pred_check
          %p421 = pneg %p140
        $region62: #{tpu_custom_call.1} parent=47 // pred_check_branch
          %423 = sbr.rel (%p421) target = $region64
        $region63: #{tpu_custom_call.1} parent=47 // pred_region
          %425 = dma.done %s417, 3072
        $region64: #{tpu_custom_call.1} parent=47 // pred_fallthru
          _
        %s426 = sand.u32 %s29, 1
        %s427 = scalar_lea.sflag [#allocation11], %s426
        %s428 = sand.u32 %s153, 1
        %s429 = smul.addr %s428, 64
        %s430 = scalar_lea.vmem [#allocation12], %s429
        // Predicated region
        $region65: #{tpu_custom_call.1} parent=47 // pred_check
          %p431 = pneg %p166
        $region66: #{tpu_custom_call.1} parent=47 // pred_check_branch
          %433 = sbr.rel (%p431) target = $region68
        $region67: #{tpu_custom_call.1} parent=47 // pred_region
          %435 = dma.done %s427, 1024
        $region68: #{tpu_custom_call.1} parent=47 // pred_fallthru
          _
        %s436 = sand.u32 %s179, 1
        %s437 = scalar_lea.sflag [#allocation14], %s436
        %s438 = sand.u32 %s179, 1
        %s439 = smul.addr %s438, 64
        %s440 = scalar_lea.vmem [#allocation13], %s439
        // Predicated region
        $region69: #{tpu_custom_call.1} parent=47 // pred_check
          %p441 = pneg %p192
        $region70: #{tpu_custom_call.1} parent=47 // pred_check_branch
          %443 = sbr.rel (%p441) target = $region72
        $region71: #{tpu_custom_call.1} parent=47 // pred_region
          %445 = dma.done %s437, 1024
        $region72: #{tpu_custom_call.1} parent=47 // pred_fallthru
          _
        %p446 = pneg %p62
        %p447 = pneg %p59
        %s448 = sand.u32 %s29, 1
        %s449 = scalar_lea.sflag [#allocation8], %s448
        %s450 = sand.u32 %s75, 1
        %s451 = scalar_lea.vmem [#allocation7], %s450
        %p452 = pneg %p88
        %p453 = pneg %p85
        %s454 = sand.u32 %s29, 1
        %s455 = scalar_lea.sflag [#allocation8], %s454
        %s456 = sand.u32 %s101, 1
        %s457 = scalar_lea.vmem [#allocation9], %s456
        %p458 = pneg %p114
        %p459 = pneg %p111
        %s460 = sand.u32 %s29, 1
        %s461 = scalar_lea.sflag [#allocation11], %s460
        %s462 = sand.u32 %s127, 1
        %s463 = smul.addr %s462, 192
        %s464 = scalar_lea.vmem [#allocation10], %s463
        %p465 = pneg %p140
        %p466 = pneg %p137
        %s467 = sand.u32 %s29, 1
        %s468 = scalar_lea.sflag [#allocation11], %s467
        %s469 = sand.u32 %s153, 1
        %s470 = smul.addr %s469, 64
        %s471 = scalar_lea.vmem [#allocation12], %s470
        %p472 = pneg %p166
        %p473 = pneg %p163
        %s474 = sand.u32 %s179, 1
        %s475 = scalar_lea.sflag [#allocation14], %s474
        %s476 = sand.u32 %s179, 1
        %s477 = smul.addr %s476, 64
        %s478 = scalar_lea.vmem [#allocation13], %s477
        %p479 = pneg %p192
        %p480 = pneg %p189
        %p481 = scmp.lt.s32.totalorder %s34, 1
        %s482 = scalar_select %p481, %s34, 1
        %s483 = scalar_lea.vmem %s6, %s482
        %p484 = pneg %p218
        %p485 = pneg %p215
        %p486 = pneg %p244
        %p487 = pneg %p241
        %s488 = smul.u32 2, %s33
        %p489 = scmp.lt.s32.totalorder %s34, 1
        %s490 = scalar_select %p489, %s34, 1
        %s491 = scalar_lea.vmem %s6, %s490
        %s492 = smul.u32 2, %s33
        %p494 = scmp.eq.s32.totalorder %s34, 0
        // Predicated region
        $region73: #{tpu_custom_call.1} parent=47 // pred_check
          %p495 = pneg %p494
        $region74: #{tpu_custom_call.1} parent=47 // pred_check_branch
          %497 = sbr.rel (%p495) target = $region76
        $region75: #{tpu_custom_call.1} parent=47 // pred_region
          %v498 = vld [vmem:[#allocation4] sm:$0xff]
          %v499 = vld [vmem:[#allocation4 + $0x8] sm:$0xff]
          %500 = vst [vmem:[#allocation15] sm:$0xff] %v498
          %501 = vst [vmem:[#allocation15 + $0x8] sm:$0xff] %v499
        $region76: #{tpu_custom_call.1} parent=47 // pred_fallthru
          _
        %v502 = vld [vmem:[#allocation15] sm:$0xff]
        %v503 = vld [vmem:[#allocation15 + $0x8] sm:$0xff]
        %504 = vadd.xlane.f32.xlu0 %v502
        %v505 = vpop.xlane.xlu0 %504
        %506 = vadd.xlane.f32.xlu0 %v503
        %v507 = vpop.xlane.xlu0 %506
        %v508 = vrcp.pop 128.0
        %v509 = vmul.f32 128.0, %v508
        %v510 = vsub.f32 1.0, %v509
        %v511 = vmul.f32 %v508, %v510
        %v512 = vadd.f32 %v508, %v511
        %vm513 = vweird.f32 %v508
        %v514 = vsel %vm513, %v508, %v512
        %v515 = vmul.f32 %v505, %v514
        %v516 = vmul.f32 %v507, %v514
        %v517 = vsub.f32 %v502, %v515
        %v518 = vsub.f32 %v503, %v516
        %v519 = vmul.f32 %v517, %v517
        %v520 = vmul.f32 %v518, %v518
        %521 = vadd.xlane.f32.xlu0 %v519
        %v522 = vpop.xlane.xlu0 %521
        %523 = vadd.xlane.f32.xlu0 %v520
        %v524 = vpop.xlane.xlu0 %523
        %v525 = vmul.f32 %v522, %v514
        %v526 = vmul.f32 %v524, %v514
        %v527 = vadd.f32 %v525, 1e-05
        %v528 = vadd.f32 %v526, 1e-05
        %v529 = vrsqrt.pop %v527
        %v530 = vmul.f32 %v529, %v527
        %v531 = vmul.f32 %v530, %v529
        %v532 = vmul.f32 0.5, %v531
        %v533 = vsub.f32 1.5, %v532
        %v534 = vmul.f32 %v529, %v533
        %vm535 = vweird.f32 %v527
        %vm536 = vweird.f32 %v529
        %vm537 = vmor %vm535, %vm536
        %v538 = vsel %vm537, %v529, %v534
        %v539 = vrsqrt.pop %v528
        %v540 = vmul.f32 %v539, %v528
        %v541 = vmul.f32 %v540, %v539
        %v542 = vmul.f32 0.5, %v541
        %v543 = vsub.f32 1.5, %v542
        %v544 = vmul.f32 %v539, %v543
        %vm545 = vweird.f32 %v528
        %vm546 = vweird.f32 %v539
        %vm547 = vmor %vm545, %vm546
        %v548 = vsel %vm547, %v539, %v544
        %v549 = vmul.f32 %v517, %v538
        %v550 = vmul.f32 %v518, %v548
        %v551 = vld [vmem:[%s401] sm:$0x1]
        %v553 = vperm.slane %v551, 0
        %v555 = vmul.f32 %v549, %v553
        %v556 = vmul.f32 %v550, %v553
        %v557 = vld [vmem:[%s410] sm:$0x1]
        %v559 = vperm.slane %v557, 0
        %v561 = vadd.f32 %v555, %v559
        %v562 = vadd.f32 %v556, %v559
        %v563 = vpack.c.bf16 %v562, %v561
        %v564 = vld [vmem:[%s420] sm:$0xff]
        %v565 = vld [vmem:[%s420 + $0x8] sm:$0xf]
        %v566 = vld [vmem:[%s420 + $0xc] sm:$0xff]
        %v567 = vld [vmem:[%s420 + $0x14] sm:$0xf]
        %v568 = vld [vmem:[%s420 + $0x18] sm:$0xff]
        %v569 = vld [vmem:[%s420 + $0x20] sm:$0xf]
        %v570 = vld [vmem:[%s420 + $0x24] sm:$0xff]
        %v571 = vld [vmem:[%s420 + $0x2c] sm:$0xf]
        %v572 = vld [vmem:[%s420 + $0x30] sm:$0xff]
        %v573 = vld [vmem:[%s420 + $0x38] sm:$0xf]
        %v574 = vld [vmem:[%s420 + $0x3c] sm:$0xff]
        %v575 = vld [vmem:[%s420 + $0x44] sm:$0xf]
        %v576 = vld [vmem:[%s420 + $0x48] sm:$0xff]
        %v577 = vld [vmem:[%s420 + $0x50] sm:$0xf]
        %v578 = vld [vmem:[%s420 + $0x54] sm:$0xff]
        %v579 = vld [vmem:[%s420 + $0x5c] sm:$0xf]
        %v580 = vld [vmem:[%s420 + $0x60] sm:$0xff]
        %v581 = vld [vmem:[%s420 + $0x68] sm:$0xf]
        %v582 = vld [vmem:[%s420 + $0x6c] sm:$0xff]
        %v583 = vld [vmem:[%s420 + $0x74] sm:$0xf]
        %v584 = vld [vmem:[%s420 + $0x78] sm:$0xff]
        %v585 = vld [vmem:[%s420 + $0x80] sm:$0xf]
        %v586 = vld [vmem:[%s420 + $0x84] sm:$0xff]
        %v587 = vld [vmem:[%s420 + $0x8c] sm:$0xf]
        %v588 = vld [vmem:[%s420 + $0x90] sm:$0xff]
        %v589 = vld [vmem:[%s420 + $0x98] sm:$0xf]
        %v590 = vld [vmem:[%s420 + $0x9c] sm:$0xff]
        %v591 = vld [vmem:[%s420 + $0xa4] sm:$0xf]
        %v592 = vld [vmem:[%s420 + $0xa8] sm:$0xff]
        %v593 = vld [vmem:[%s420 + $0xb0] sm:$0xf]
        %v594 = vld [vmem:[%s420 + $0xb4] sm:$0xff]
        %v595 = vld [vmem:[%s420 + $0xbc] sm:$0xf]
        %v628 = vunpack.c.l.b16 %v564
        %v629 = vunpack.c.h.b16 %v564
        %v630 = vunpack.c.l.b16 %v565
        %v631 = vunpack.c.l.b16 %v566
        %v632 = vunpack.c.h.b16 %v566
        %v633 = vunpack.c.l.b16 %v567
        %v634 = vunpack.c.l.b16 %v568
        %v635 = vunpack.c.h.b16 %v568
        %v636 = vunpack.c.l.b16 %v569
        %v637 = vunpack.c.l.b16 %v570
        %v638 = vunpack.c.h.b16 %v570
        %v639 = vunpack.c.l.b16 %v571
        %v640 = vunpack.c.l.b16 %v572
        %v641 = vunpack.c.h.b16 %v572
        %v642 = vunpack.c.l.b16 %v573
        %v643 = vunpack.c.l.b16 %v574
        %v644 = vunpack.c.h.b16 %v574
        %v645 = vunpack.c.l.b16 %v575
        %v646 = vunpack.c.l.b16 %v576
        %v647 = vunpack.c.h.b16 %v576
        %v648 = vunpack.c.l.b16 %v577
        %v649 = vunpack.c.l.b16 %v578
        %v650 = vunpack.c.h.b16 %v578
        %v651 = vunpack.c.l.b16 %v579
        %v652 = vunpack.c.l.b16 %v580
        %v653 = vunpack.c.h.b16 %v580
        %v654 = vunpack.c.l.b16 %v581
        %v655 = vunpack.c.l.b16 %v582
        %v656 = vunpack.c.h.b16 %v582
        %v657 = vunpack.c.l.b16 %v583
        %v658 = vunpack.c.l.b16 %v584
        %v659 = vunpack.c.h.b16 %v584
        %v660 = vunpack.c.l.b16 %v585
        %v661 = vunpack.c.l.b16 %v586
        %v662 = vunpack.c.h.b16 %v586
        %v663 = vunpack.c.l.b16 %v587
        %v664 = vunpack.c.l.b16 %v588
        %v665 = vunpack.c.h.b16 %v588
        %v666 = vunpack.c.l.b16 %v589
        %v667 = vunpack.c.l.b16 %v590
        %v668 = vunpack.c.h.b16 %v590
        %v669 = vunpack.c.l.b16 %v591
        %v670 = vunpack.c.l.b16 %v592
        %v671 = vunpack.c.h.b16 %v592
        %v672 = vunpack.c.l.b16 %v593
        %v673 = vunpack.c.l.b16 %v594
        %v674 = vunpack.c.h.b16 %v594
        %v675 = vunpack.c.l.b16 %v595
        %v676 = vpack.c.b16 %v631, %v628
        %v677 = vpack.c.b16 %v632, %v629
        %v678 = vpack.c.b16 %v633, %v630
        %v679 = vpack.c.b16 %v637, %v634
        %v680 = vpack.c.b16 %v638, %v635
        %v681 = vpack.c.b16 %v639, %v636
        %v682 = vpack.c.b16 %v643, %v640
        %v683 = vpack.c.b16 %v644, %v641
        %v684 = vpack.c.b16 %v645, %v642
        %v685 = vpack.c.b16 %v649, %v646
        %v686 = vpack.c.b16 %v650, %v647
        %v687 = vpack.c.b16 %v651, %v648
        %v688 = vpack.c.b16 %v655, %v652
        %v689 = vpack.c.b16 %v656, %v653
        %v690 = vpack.c.b16 %v657, %v654
        %v691 = vpack.c.b16 %v661, %v658
        %v692 = vpack.c.b16 %v662, %v659
        %v693 = vpack.c.b16 %v663, %v660
        %v694 = vpack.c.b16 %v667, %v664
        %v695 = vpack.c.b16 %v668, %v665
        %v696 = vpack.c.b16 %v669, %v666
        %v697 = vpack.c.b16 %v673, %v670
        %v698 = vpack.c.b16 %v674, %v671
        %v699 = vpack.c.b16 %v675, %v672
        %724 = vmatpush.bf16.msra.mxu0 %v697
        %725 = vmatpush.bf16.msra.mxu0 %v694
        %726 = vmatpush.bf16.msra.mxu0 %v691
        %727 = vmatpush.bf16.msra.mxu0 %v688
        %728 = vmatpush.bf16.msra.mxu0 %v685
        %729 = vmatpush.bf16.msra.mxu0 %v682
        %730 = vmatpush.bf16.msra.mxu0 %v679
        %731 = vmatpush.bf16.msra.mxu0 %v676
        %732 = vmatmul.bf16.gmra.mxu0 %v563
        %v733 = vpop.f32.mrf.mxu0
        %v734 = vadd.f32 0.0, %v733
        %v735 = vpop.f32.mrf.mxu0
        %v736 = vadd.f32 0.0, %v735
        %737 = vdwg.mxu0
        %738 = vmatpush.bf16.msra.mxu0 %v698
        %739 = vmatpush.bf16.msra.mxu0 %v695
        %740 = vmatpush.bf16.msra.mxu0 %v692
        %741 = vmatpush.bf16.msra.mxu0 %v689
        %742 = vmatpush.bf16.msra.mxu0 %v686
        %743 = vmatpush.bf16.msra.mxu0 %v683
        %744 = vmatpush.bf16.msra.mxu0 %v680
        %745 = vmatpush.bf16.msra.mxu0 %v677
        %746 = vmatmul.bf16.gmra.mxu0 %v563
        %v747 = vpop.f32.mrf.mxu0
        %v748 = vadd.f32 0.0, %v747
        %v749 = vpop.f32.mrf.mxu0
        %v750 = vadd.f32 0.0, %v749
        %751 = vdwg.mxu0
        %752 = vmatpush.bf16.msra.mxu0 %v699
        %753 = vmatpush.bf16.msra.mxu0 %v696
        %754 = vmatpush.bf16.msra.mxu0 %v693
        %755 = vmatpush.bf16.msra.mxu0 %v690
        %756 = vmatpush.bf16.msra.mxu0 %v687
        %757 = vmatpush.bf16.msra.mxu0 %v684
        %758 = vmatpush.bf16.msra.mxu0 %v681
        %759 = vmatpush.bf16.msra.mxu0 %v678
        %760 = vmatmul.bf16.gmra.mxu0 %v563
        %v761 = vpop.f32.mrf.mxu0
        %v762 = vadd.f32 0.0, %v761
        %v763 = vpop.f32.mrf.mxu0
        %v764 = vadd.f32 0.0, %v763
        %765 = vdwg.mxu0
        %v766 = vpack.c.bf16 %v748, %v734
        %v767 = vpack.c.bf16 %v762, %v762
        %v768 = vpack.c.bf16 %v750, %v736
        %v769 = vpack.c.bf16 %v764, %v764
        %770 = vst [vmem:[#allocation2] sm:$0xff] %v766
        %771 = vst [vmem:[#allocation2 + $0x8] sm:$0xf] %v767
        %772 = vst [vmem:[#allocation2 + $0xc] sm:$0xff] %v768
        %773 = vst [vmem:[#allocation2 + $0x14] sm:$0xf] %v769
        %v774 = vld [vmem:[#allocation2] sm:$0xff]
        %v775 = vld [vmem:[#allocation2 + $0x8] sm:$0xf]
        %v777 = vunpack.c.h.b16 %v774
        %v778 = vpack.c.b16 %v777, %v777
        %vm779 = vcmask 523264
        %v781 = vsel %vm779, %v774, 0
        %v784 = vsel %vm779, %v778, 0
        %786 = vmatpush.bf16.xpose.msra.mxu0 0
        %787 = vmatpush.bf16.xpose.msra.mxu0 0
        %788 = vmatpush.bf16.xpose.msra.mxu0 0
        %789 = vmatpush.bf16.xpose.msra.mxu0 0
        %790 = vmatpush.bf16.xpose.msra.mxu0 0
        %791 = vmatpush.bf16.xpose.msra.mxu0 0
        %792 = vmatpush.bf16.xpose.msra.mxu0 0
        %793 = vmatpush.bf16.xpose.msra.mxu0 %v784
        %794 = vmatmul.bf16.gmra.mxu0 %v781
        %v795 = vpop.f32.mrf.mxu0
        %v796 = vadd.f32 0.0, %v795
        %v797 = vpop.f32.mrf.mxu0
        %798 = vdwg.mxu0
        %vm799 = vcmask 64512
        %v800 = vsel %vm799, %v796, -inf
        %801 = vmax.xlane.f32.xlu0 %v800
        %v802 = vpop.xlane.xlu0 %801
        %v803 = vsub.f32 %v796, %v802
        %v804 = vmul.f32 %v803, 1.442695
        %v805 = vpow.pop %v804
        %v806 = vsel %vm799, %v805, 0.0
        %807 = vadd.xlane.f32.xlu0 %v806
        %v808 = vpop.xlane.xlu0 %807
        %v809 = vrcp.pop %v808
        %v810 = vmul.f32 %v808, %v809
        %v811 = vsub.f32 1.0, %v810
        %v812 = vmul.f32 %v809, %v811
        %v813 = vadd.f32 %v809, %v812
        %vm814 = vweird.f32 %v808
        %vm815 = vweird.f32 %v809
        %vm816 = vmor %vm814, %vm815
        %v817 = vsel %vm816, %v809, %v813
        %v818 = vand.u32 2147483647, %v808
        %vm819 = vcmp.eq.f32.partialorder %v818, 8.507059e+37
        %v820 = vand.u32 %v808, 2147483648
        %v821 = vor.u32 1.1754944e-38, %v820
        %v822 = vsel %vm819, %v821, %v817
        %v823 = vmul.f32 %v805, %v822
        %v824 = vpack.c.bf16 %v823, %v823
        %v826 = vsel %vm799, %v824, 0
        %vm828 = vcmask 1043456
        %v830 = vsel %vm828, %v775, 0
        %832 = vmatpush.bf16.msra.mxu0 0
        %833 = vmatpush.bf16.msra.mxu0 0
        %834 = vmatpush.bf16.msra.mxu0 0
        %835 = vmatpush.bf16.msra.mxu0 0
        %836 = vmatpush.bf16.msra.mxu0 0
        %837 = vmatpush.bf16.msra.mxu0 0
        %838 = vmatpush.bf16.msra.mxu0 0
        %839 = vmatpush.bf16.msra.mxu0 %v830
        %840 = vmatmul.bf16.gmra.mxu0 %v826
        %v841 = vpop.f32.mrf.mxu0
        %v842 = vadd.f32 0.0, %v841
        %v843 = vpop.f32.mrf.mxu0
        %844 = vdwg.mxu0
        %v845 = vpack.c.bf16 %v842, %v842
        %v846 = vunpack.c.l.b16 %v774
        %v847 = vpack.c.b16 %v846, %v846
        %848 = vrot.lane.b32.xlu0 %v847, 64
        %v849 = vpop.permute.xlu0 %848
        %850 = vrot.lane.b32.xlu0 %v778, 64
        %v851 = vpop.permute.xlu0 %850
        %v853 = vsel %vm779, %v849, 0
        %v856 = vsel %vm779, %v851, 0
        %858 = vmatpush.bf16.xpose.msra.mxu0 0
        %859 = vmatpush.bf16.xpose.msra.mxu0 0
        %860 = vmatpush.bf16.xpose.msra.mxu0 0
        %861 = vmatpush.bf16.xpose.msra.mxu0 0
        %862 = vmatpush.bf16.xpose.msra.mxu0 0
        %863 = vmatpush.bf16.xpose.msra.mxu0 0
        %864 = vmatpush.bf16.xpose.msra.mxu0 0
        %865 = vmatpush.bf16.xpose.msra.mxu0 %v856
        %866 = vmatmul.bf16.gmra.mxu0 %v853
        %v867 = vpop.f32.mrf.mxu0
        %v868 = vadd.f32 0.0, %v867
        %v869 = vpop.f32.mrf.mxu0
        %870 = vdwg.mxu0
        %v871 = vsel %vm799, %v868, -inf
        %872 = vmax.xlane.f32.xlu0 %v871
        %v873 = vpop.xlane.xlu0 %872
        %v874 = vsub.f32 %v868, %v873
        %v875 = vmul.f32 %v874, 1.442695
        %v876 = vpow.pop %v875
        %v877 = vsel %vm799, %v876, 0.0
        %878 = vadd.xlane.f32.xlu0 %v877
        %v879 = vpop.xlane.xlu0 %878
        %v880 = vrcp.pop %v879
        %v881 = vmul.f32 %v879, %v880
        %v882 = vsub.f32 1.0, %v881
        %v883 = vmul.f32 %v880, %v882
        %v884 = vadd.f32 %v880, %v883
        %vm885 = vweird.f32 %v879
        %vm886 = vweird.f32 %v880
        %vm887 = vmor %vm885, %vm886
        %v888 = vsel %vm887, %v880, %v884
        %v889 = vand.u32 2147483647, %v879
        %vm890 = vcmp.eq.f32.partialorder %v889, 8.507059e+37
        %v891 = vand.u32 %v879, 2147483648
        %v892 = vor.u32 1.1754944e-38, %v891
        %v893 = vsel %vm890, %v892, %v888
        %v894 = vmul.f32 %v876, %v893
        %v895 = vpack.c.bf16 %v894, %v894
        %v897 = vunpack.c.l.b16 %v775
        %v898 = vpack.c.b16 %v897, %v897
        %899 = vrot.lane.b32.xlu0 %v898, 64
        %v900 = vpop.permute.xlu0 %899
        %v902 = vsel %vm799, %v895, 0
        %v905 = vsel %vm828, %v900, 0
        %907 = vmatpush.bf16.msra.mxu0 0
        %908 = vmatpush.bf16.msra.mxu0 0
        %909 = vmatpush.bf16.msra.mxu0 0
        %910 = vmatpush.bf16.msra.mxu0 0
        %911 = vmatpush.bf16.msra.mxu0 0
        %912 = vmatpush.bf16.msra.mxu0 0
        %913 = vmatpush.bf16.msra.mxu0 0
        %914 = vmatpush.bf16.msra.mxu0 %v905
        %915 = vmatmul.bf16.gmra.mxu0 %v902
        %v916 = vpop.f32.mrf.mxu0
        %v917 = vadd.f32 0.0, %v916
        %v918 = vpop.f32.mrf.mxu0
        %919 = vdwg.mxu0
        %v920 = vpack.c.bf16 %v917, %v917
        %v922 = vunpack.c.l.b16 %v920
        %v923 = vpack.c.b16 %v922, %v922
        %924 = vrot.lane.b32.xlu0 %v923, 64
        %v925 = vpop.permute.xlu0 %924
        %v928 = vsel %vm779, %v845, %v925
        %930 = vst [vmem:[#allocation3] sm:$0xf] %v928
        %v931 = vld [vmem:[#allocation2 + $0xc] sm:$0xff]
        %v932 = vld [vmem:[#allocation2 + $0x14] sm:$0xf]
        %v934 = vunpack.c.h.b16 %v931
        %v935 = vpack.c.b16 %v934, %v934
        %v937 = vsel %vm779, %v931, 0
        %v940 = vsel %vm779, %v935, 0
        %942 = vmatpush.bf16.xpose.msra.mxu0 0
        %943 = vmatpush.bf16.xpose.msra.mxu0 0
        %944 = vmatpush.bf16.xpose.msra.mxu0 0
        %945 = vmatpush.bf16.xpose.msra.mxu0 0
        %946 = vmatpush.bf16.xpose.msra.mxu0 0
        %947 = vmatpush.bf16.xpose.msra.mxu0 0
        %948 = vmatpush.bf16.xpose.msra.mxu0 0
        %949 = vmatpush.bf16.xpose.msra.mxu0 %v940
        %950 = vmatmul.bf16.gmra.mxu0 %v937
        %v951 = vpop.f32.mrf.mxu0
        %v952 = vadd.f32 0.0, %v951
        %v953 = vpop.f32.mrf.mxu0
        %954 = vdwg.mxu0
        %v955 = vsel %vm799, %v952, -inf
        %956 = vmax.xlane.f32.xlu0 %v955
        %v957 = vpop.xlane.xlu0 %956
        %v958 = vsub.f32 %v952, %v957
        %v959 = vmul.f32 %v958, 1.442695
        %v960 = vpow.pop %v959
        %v961 = vsel %vm799, %v960, 0.0
        %962 = vadd.xlane.f32.xlu0 %v961
        %v963 = vpop.xlane.xlu0 %962
        %v964 = vrcp.pop %v963
        %v965 = vmul.f32 %v963, %v964
        %v966 = vsub.f32 1.0, %v965
        %v967 = vmul.f32 %v964, %v966
        %v968 = vadd.f32 %v964, %v967
        %vm969 = vweird.f32 %v963
        %vm970 = vweird.f32 %v964
        %vm971 = vmor %vm969, %vm970
        %v972 = vsel %vm971, %v964, %v968
        %v973 = vand.u32 2147483647, %v963
        %vm974 = vcmp.eq.f32.partialorder %v973, 8.507059e+37
        %v975 = vand.u32 %v963, 2147483648
        %v976 = vor.u32 1.1754944e-38, %v975
        %v977 = vsel %vm974, %v976, %v972
        %v978 = vmul.f32 %v960, %v977
        %v979 = vpack.c.bf16 %v978, %v978
        %v981 = vsel %vm799, %v979, 0
        %v984 = vsel %vm828, %v932, 0
        %986 = vmatpush.bf16.msra.mxu0 0
        %987 = vmatpush.bf16.msra.mxu0 0
        %988 = vmatpush.bf16.msra.mxu0 0
        %989 = vmatpush.bf16.msra.mxu0 0
        %990 = vmatpush.bf16.msra.mxu0 0
        %991 = vmatpush.bf16.msra.mxu0 0
        %992 = vmatpush.bf16.msra.mxu0 0
        %993 = vmatpush.bf16.msra.mxu0 %v984
        %994 = vmatmul.bf16.gmra.mxu0 %v981
        %v995 = vpop.f32.mrf.mxu0
        %v996 = vadd.f32 0.0, %v995
        %v997 = vpop.f32.mrf.mxu0
        %998 = vdwg.mxu0
        %v999 = vpack.c.bf16 %v996, %v996
        %v1000 = vunpack.c.l.b16 %v931
        %v1001 = vpack.c.b16 %v1000, %v1000
        %1002 = vrot.lane.b32.xlu0 %v1001, 64
        %v1003 = vpop.permute.xlu0 %1002
        %1004 = vrot.lane.b32.xlu0 %v935, 64
        %v1005 = vpop.permute.xlu0 %1004
        %v1007 = vsel %vm779, %v1003, 0
        %v1010 = vsel %vm779, %v1005, 0
        %1012 = vmatpush.bf16.xpose.msra.mxu0 0
        %1013 = vmatpush.bf16.xpose.msra.mxu0 0
        %1014 = vmatpush.bf16.xpose.msra.mxu0 0
        %1015 = vmatpush.bf16.xpose.msra.mxu0 0
        %1016 = vmatpush.bf16.xpose.msra.mxu0 0
        %1017 = vmatpush.bf16.xpose.msra.mxu0 0
        %1018 = vmatpush.bf16.xpose.msra.mxu0 0
        %1019 = vmatpush.bf16.xpose.msra.mxu0 %v1010
        %1020 = vmatmul.bf16.gmra.mxu0 %v1007
        %v1021 = vpop.f32.mrf.mxu0
        %v1022 = vadd.f32 0.0, %v1021
        %v1023 = vpop.f32.mrf.mxu0
        %1024 = vdwg.mxu0
        %v1025 = vsel %vm799, %v1022, -inf
        %1026 = vmax.xlane.f32.xlu0 %v1025
        %v1027 = vpop.xlane.xlu0 %1026
        %v1028 = vsub.f32 %v1022, %v1027
        %v1029 = vmul.f32 %v1028, 1.442695
        %v1030 = vpow.pop %v1029
        %v1031 = vsel %vm799, %v1030, 0.0
        %1032 = vadd.xlane.f32.xlu0 %v1031
        %v1033 = vpop.xlane.xlu0 %1032
        %v1034 = vrcp.pop %v1033
        %v1035 = vmul.f32 %v1033, %v1034
        %v1036 = vsub.f32 1.0, %v1035
        %v1037 = vmul.f32 %v1034, %v1036
        %v1038 = vadd.f32 %v1034, %v1037
        %vm1039 = vweird.f32 %v1033
        %vm1040 = vweird.f32 %v1034
        %vm1041 = vmor %vm1039, %vm1040
        %v1042 = vsel %vm1041, %v1034, %v1038
        %v1043 = vand.u32 2147483647, %v1033
        %vm1044 = vcmp.eq.f32.partialorder %v1043, 8.507059e+37
        %v1045 = vand.u32 %v1033, 2147483648
        %v1046 = vor.u32 1.1754944e-38, %v1045
        %v1047 = vsel %vm1044, %v1046, %v1042
        %v1048 = vmul.f32 %v1030, %v1047
        %v1049 = vpack.c.bf16 %v1048, %v1048
        %v1051 = vunpack.c.l.b16 %v932
        %v1052 = vpack.c.b16 %v1051, %v1051
        %1053 = vrot.lane.b32.xlu0 %v1052, 64
        %v1054 = vpop.permute.xlu0 %1053
        %v1056 = vsel %vm799, %v1049, 0
        %v1059 = vsel %vm828, %v1054, 0
        %1061 = vmatpush.bf16.msra.mxu0 0
        %1062 = vmatpush.bf16.msra.mxu0 0
        %1063 = vmatpush.bf16.msra.mxu0 0
        %1064 = vmatpush.bf16.msra.mxu0 0
        %1065 = vmatpush.bf16.msra.mxu0 0
        %1066 = vmatpush.bf16.msra.mxu0 0
        %1067 = vmatpush.bf16.msra.mxu0 0
        %1068 = vmatpush.bf16.msra.mxu0 %v1059
        %1069 = vmatmul.bf16.gmra.mxu0 %v1056
        %v1070 = vpop.f32.mrf.mxu0
        %v1071 = vadd.f32 0.0, %v1070
        %v1072 = vpop.f32.mrf.mxu0
        %1073 = vdwg.mxu0
        %v1074 = vpack.c.bf16 %v1071, %v1071
        %v1076 = vunpack.c.l.b16 %v1074
        %v1077 = vpack.c.b16 %v1076, %v1076
        %1078 = vrot.lane.b32.xlu0 %v1077, 64
        %v1079 = vpop.permute.xlu0 %1078
        %v1082 = vsel %vm779, %v999, %v1079
        %1084 = vst [vmem:[#allocation3 + $0x4] sm:$0xf] %v1082
        %v1085 = vld [vmem:[#allocation3] sm:$0xf]
        %v1086 = vld [vmem:[#allocation3 + $0x4] sm:$0xf]
        %v1087 = vld [vmem:[%s430] sm:$0xf]
        %v1088 = vld [vmem:[%s430 + $0x4] sm:$0xf]
        %v1089 = vld [vmem:[%s430 + $0x8] sm:$0xf]
        %v1090 = vld [vmem:[%s430 + $0xc] sm:$0xf]
        %v1091 = vld [vmem:[%s430 + $0x10] sm:$0xf]
        %v1092 = vld [vmem:[%s430 + $0x14] sm:$0xf]
        %v1093 = vld [vmem:[%s430 + $0x18] sm:$0xf]
        %v1094 = vld [vmem:[%s430 + $0x1c] sm:$0xf]
        %v1095 = vld [vmem:[%s430 + $0x20] sm:$0xf]
        %v1096 = vld [vmem:[%s430 + $0x24] sm:$0xf]
        %v1097 = vld [vmem:[%s430 + $0x28] sm:$0xf]
        %v1098 = vld [vmem:[%s430 + $0x2c] sm:$0xf]
        %v1099 = vld [vmem:[%s430 + $0x30] sm:$0xf]
        %v1100 = vld [vmem:[%s430 + $0x34] sm:$0xf]
        %v1101 = vld [vmem:[%s430 + $0x38] sm:$0xf]
        %v1102 = vld [vmem:[%s430 + $0x3c] sm:$0xf]
        %v1105 = vunpack.c.l.b16 %v1085
        %v1106 = vunpack.c.l.b16 %v1086
        %v1107 = vpack.c.b16 %v1106, %v1105
        %v1125 = vunpack.c.l.b16 %v1087
        %v1126 = vunpack.c.l.b16 %v1088
        %v1127 = vunpack.c.l.b16 %v1089
        %v1128 = vunpack.c.l.b16 %v1090
        %v1129 = vunpack.c.l.b16 %v1091
        %v1130 = vunpack.c.l.b16 %v1092
        %v1131 = vunpack.c.l.b16 %v1093
        %v1132 = vunpack.c.l.b16 %v1094
        %v1133 = vunpack.c.l.b16 %v1095
        %v1134 = vunpack.c.l.b16 %v1096
        %v1135 = vunpack.c.l.b16 %v1097
        %v1136 = vunpack.c.l.b16 %v1098
        %v1137 = vunpack.c.l.b16 %v1099
        %v1138 = vunpack.c.l.b16 %v1100
        %v1139 = vunpack.c.l.b16 %v1101
        %v1140 = vunpack.c.l.b16 %v1102
        %v1141 = vpack.c.b16 %v1126, %v1125
        %v1142 = vpack.c.b16 %v1128, %v1127
        %v1143 = vpack.c.b16 %v1130, %v1129
        %v1144 = vpack.c.b16 %v1132, %v1131
        %v1145 = vpack.c.b16 %v1134, %v1133
        %v1146 = vpack.c.b16 %v1136, %v1135
        %v1147 = vpack.c.b16 %v1138, %v1137
        %v1148 = vpack.c.b16 %v1140, %v1139
        %1157 = vmatpush.bf16.msra.mxu0 %v1148
        %1158 = vmatpush.bf16.msra.mxu0 %v1147
        %1159 = vmatpush.bf16.msra.mxu0 %v1146
        %1160 = vmatpush.bf16.msra.mxu0 %v1145
        %1161 = vmatpush.bf16.msra.mxu0 %v1144
        %1162 = vmatpush.bf16.msra.mxu0 %v1143
        %1163 = vmatpush.bf16.msra.mxu0 %v1142
        %1164 = vmatpush.bf16.msra.mxu0 %v1141
        %1165 = vmatmul.bf16.gmra.mxu0 %v1107
        %v1166 = vpop.f32.mrf.mxu0
        %v1167 = vadd.f32 0.0, %v1166
        %v1168 = vpop.f32.mrf.mxu0
        %v1169 = vadd.f32 0.0, %v1168
        %1170 = vdwg.mxu0
        %v1171 = vmul.f32 %v1167, 0.5
        %v1172 = vmul.f32 %v1169, 0.5
        %v1173 = vmul.f32 %v502, 0.5
        %v1174 = vmul.f32 %v503, 0.5
        %v1175 = vadd.f32 %v1171, %v1173
        %v1176 = vadd.f32 %v1172, %v1174
        %v1177 = vpack.c.bf16 %v1176, %v1175
        %v1178 = vld [vmem:[%s440] sm:$0xf]
        %v1179 = vld [vmem:[%s440 + $0x4] sm:$0xf]
        %v1180 = vld [vmem:[%s440 + $0x8] sm:$0xf]
        %v1181 = vld [vmem:[%s440 + $0xc] sm:$0xf]
        %v1182 = vld [vmem:[%s440 + $0x10] sm:$0xf]
        %v1183 = vld [vmem:[%s440 + $0x14] sm:$0xf]
        %v1184 = vld [vmem:[%s440 + $0x18] sm:$0xf]
        %v1185 = vld [vmem:[%s440 + $0x1c] sm:$0xf]
        %v1186 = vld [vmem:[%s440 + $0x20] sm:$0xf]
        %v1187 = vld [vmem:[%s440 + $0x24] sm:$0xf]
        %v1188 = vld [vmem:[%s440 + $0x28] sm:$0xf]
        %v1189 = vld [vmem:[%s440 + $0x2c] sm:$0xf]
        %v1190 = vld [vmem:[%s440 + $0x30] sm:$0xf]
        %v1191 = vld [vmem:[%s440 + $0x34] sm:$0xf]
        %v1192 = vld [vmem:[%s440 + $0x38] sm:$0xf]
        %v1193 = vld [vmem:[%s440 + $0x3c] sm:$0xf]
        %v1194 = vld [vmem:[%s491] sm:$0x1]
        %v1196 = vperm.slane %v1194, 0
        %v1214 = vunpack.c.l.b16 %v1178
        %v1215 = vunpack.c.l.b16 %v1179
        %v1216 = vunpack.c.l.b16 %v1180
        %v1217 = vunpack.c.l.b16 %v1181
        %v1218 = vunpack.c.l.b16 %v1182
        %v1219 = vunpack.c.l.b16 %v1183
        %v1220 = vunpack.c.l.b16 %v1184
        %v1221 = vunpack.c.l.b16 %v1185
        %v1222 = vunpack.c.l.b16 %v1186
        %v1223 = vunpack.c.l.b16 %v1187
        %v1224 = vunpack.c.l.b16 %v1188
        %v1225 = vunpack.c.l.b16 %v1189
        %v1226 = vunpack.c.l.b16 %v1190
        %v1227 = vunpack.c.l.b16 %v1191
        %v1228 = vunpack.c.l.b16 %v1192
        %v1229 = vunpack.c.l.b16 %v1193
        %v1230 = vpack.c.b16 %v1215, %v1214
        %v1231 = vpack.c.b16 %v1217, %v1216
        %v1232 = vpack.c.b16 %v1219, %v1218
        %v1233 = vpack.c.b16 %v1221, %v1220
        %v1234 = vpack.c.b16 %v1223, %v1222
        %v1235 = vpack.c.b16 %v1225, %v1224
        %v1236 = vpack.c.b16 %v1227, %v1226
        %v1237 = vpack.c.b16 %v1229, %v1228
        %1246 = vmatpush.bf16.msra.mxu0 %v1237
        %1247 = vmatpush.bf16.msra.mxu0 %v1236
        %1248 = vmatpush.bf16.msra.mxu0 %v1235
        %1249 = vmatpush.bf16.msra.mxu0 %v1234
        %1250 = vmatpush.bf16.msra.mxu0 %v1233
        %1251 = vmatpush.bf16.msra.mxu0 %v1232
        %1252 = vmatpush.bf16.msra.mxu0 %v1231
        %1253 = vmatpush.bf16.msra.mxu0 %v1230
        %1254 = vmatmul.bf16.gmra.mxu0 %v1177
        %v1255 = vpop.f32.mrf.mxu0
        %v1256 = vadd.f32 %v1196, %v1255
        %v1257 = vpop.f32.mrf.mxu0
        %v1258 = vadd.f32 %v1196, %v1257
        %1259 = vdwg.mxu0
        %v1260 = vmul.f32 %v1256, 0.5
        %v1261 = vmul.f32 %v1258, 0.5
        %v1262 = vmul.f32 %v1175, 0.5
        %v1263 = vmul.f32 %v1176, 0.5
        %v1264 = vadd.f32 %v1260, %v1262
        %v1265 = vadd.f32 %v1261, %v1263
        %1266 = vst [vmem:[#allocation15] sm:$0xff] %v1264
        %1267 = vst [vmem:[#allocation15 + $0x8] sm:$0xff] %v1265
        // Predicated region
        $region77: #{tpu_custom_call.1} parent=47 // pred_check
          %p1268 = pneg %p241
        $region78: #{tpu_custom_call.1} parent=47 // pred_check_branch
          %1270 = sbr.rel (%p1268) target = $region80
        $region79: #{tpu_custom_call.1} parent=47 // pred_region
          %s1271 = smul.u32 2, %s33
          %1273 = vsyncadd [#allocation6], 0
          %s1274 = smul.addr %s1271, 8
          %s1275 = scalar_lea.hbm %s7, %s1274
          %s1276 = sshll.u32 [#allocation15], 4
          %s1277 = int_to_ptr.vmem [resolvable:$true] %s1276
          %s1278 = sshll.u32 %s1275, 4
          %s1279 = int_to_ptr.hbm [resolvable:$true] %s1278
          %1284 = dma.vmem_to_hbm [thread:$0]  %s1277, 256, %s1279, [#allocation6], 128, 128, 8
        $region80: #{tpu_custom_call.1} parent=47 // pred_fallthru
          _
        // Predicated region
        $region81: #{tpu_custom_call.1} parent=47 // pred_check
          %p1285 = pneg %p241
        $region82: #{tpu_custom_call.1} parent=47 // pred_check_branch
          %1287 = sbr.rel (%p1285) target = $region84
        $region83: #{tpu_custom_call.1} parent=47 // pred_region
          %1289 = dma.done [#allocation6], 256
        $region84: #{tpu_custom_call.1} parent=47 // pred_fallthru
          _
      $region48: #{tpu_custom_call.1} parent=5 // pred_fallthru
        _
      %p1290 = scmp.le.s32.totalorder 2, %s24
      // Predicated region
      $region85: #{tpu_custom_call.1} parent=5 // pred_check
        %p1291 = pneg %p1290
      $region86: #{tpu_custom_call.1} parent=5 // pred_check_branch
        %1293 = sbr.rel (%p1291) target = $region88
      $region87: #{tpu_custom_call.1} parent=5 // pred_region
        %s1294 = ssub.s32 %s24, 2
      $region88: #{tpu_custom_call.1} parent=5 // pred_fallthru
        _
    $region6: #{tpu_custom_call.1} parent=1 // loop_footer
      %s28 = sadd.s32 1, %s24
    $region7: #{tpu_custom_call.1} parent=1 // loop_footer_branch
      %23 = sbr.rel target = $region3
    $region8: #{tpu_custom_call.1} parent=1 // loop_exit
      _
    %1295 = vsyncpa [#allocation5], 1
    %s1296 = scalar_lea.sflag [#allocation5], 1
    %1297 = vsyncpa %s1296, 1
    %1298 = vsyncpa [#allocation8], 1
    %s1299 = scalar_lea.sflag [#allocation8], 1
    %1300 = vsyncpa %s1299, 1
    %1301 = vsyncpa [#allocation11], 1
    %s1302 = scalar_lea.sflag [#allocation11], 1
    %1303 = vsyncpa %s1302, 1
    %1304 = vsyncpa [#allocation14], 1
    %s1305 = scalar_lea.sflag [#allocation14], 1
    %1306 = vsyncpa %s1305, 1
    %1307 = vsyncpa [#allocation6], 1
    %s1308 = scalar_lea.sflag [#allocation6], 1
    %1309 = vsyncpa %s1308, 1

</llo_original>
